<compile_context>
chip_gen: v5e
topology: v5e:2x2
jax: 0.10.0
libtpu: 0.0.40
codegen_flags: <defaults>
</compile_context>

<pallas_src>
import functools
import numpy as np
import jax
import jax.numpy as jnp
from jax import lax
from jax.experimental import pallas as pl
from jax.experimental.pallas import tpu as pltpu

EPS = 1e-5          # nn.LayerNorm default eps
NEG_SLOPE = 0.01    # nn.LeakyReLU default negative_slope
LANE = 128
SUBLANE = 8


def _round_up(x, m):
    return (x + m - 1) // m * m


def _choose_tm(n):
    """Largest row tile in {512..16} that still gives >= 2 grid steps
    (keeps both v7x TensorCores busy); otherwise one tile covering the batch."""
    np8 = _round_up(max(n, 1), SUBLANE)
    for tm in (512, 256, 128, 64, 32, 16):
        if np8 >= 2 * tm:
            return tm
    return min(np8, 512)


def res_layer_kernel(x_ref, m1_ref, m2_ref, aff_ref, o_ref, *, inv_d):
    """conv1(matmul)+LN -> conv2(matmul)+LN -> residual -> LeakyReLU (fused)."""
    # Packed affine slab: rows 0..5 = b1, g1, be1, b2, g2, be2 (rows 6,7 unused)
    aff = aff_ref[...]                                   # (8, D1p) f32
    b1, g1, be1 = aff[0:1], aff[1:2], aff[2:3]
    b2, g2, be2 = aff[3:4], aff[4:5], aff[5:6]

    # conv1 as matmul: bf16 operands on the MXU, f32 accumulation, f32 bias add
    h = jnp.dot(x_ref[...], m1_ref[...],
                preferred_element_type=jnp.float32) + b1

    # LayerNorm over the true Cout*H*W lanes.  Padded lanes of h are exact
    # zeros, so a single fused pass (sum, sum-of-squares) with the true-D
    # divisor gives correct statistics without masking.  Lane-axis sums ride
    # the XLU slot (free next to MXU/VPU work) -- keep them as jnp.sum.
    mu = jnp.sum(h, axis=-1, keepdims=True) * inv_d
    ms = jnp.sum(h * h, axis=-1, keepdims=True) * inv_d
    var = jnp.maximum(ms - mu * mu, 0.0)                 # guard rounding negatives
    xn = (h - mu) * lax.rsqrt(var + EPS) * g1 + be1
    # (gamma/beta are zero-padded, so padded lanes of xn stay exactly zero)

    # conv2 as matmul + bias
    y = jnp.dot(xn.astype(jnp.bfloat16), m2_ref[...],
                preferred_element_type=jnp.float32) + b2
    mu2 = jnp.sum(y, axis=-1, keepdims=True) * inv_d
    ms2 = jnp.sum(y * y, axis=-1, keepdims=True) * inv_d
    var2 = jnp.maximum(ms2 - mu2 * mu2, 0.0)
    yn = (y - mu2) * lax.rsqrt(var2 + EPS) * g2 + be2

    # residual add + LeakyReLU (f32 math, cast to output dtype on store)
    s = xn + yn
    o_ref[...] = jnp.maximum(s, NEG_SLOPE * s).astype(o_ref.dtype)


def conv_to_matmul(weight, bias, H, W, rows_pad, cols_pad):
    """Toeplitz matrix for a stride-1 'same' Conv2d in C-major flat layout,
    zero-padded to (rows_pad, cols_pad) for lane-dense TPU tiles (bf16)."""
    w = np.asarray(weight, dtype=np.float32)
    Cout, Cin, KH, KW = w.shape
    ph, pw = KH // 2, KW // 2
    M = np.zeros((rows_pad, cols_pad), np.float32)
    for co in range(Cout):
        for ci in range(Cin):
            for kh in range(KH):
                for kw in range(KW):
                    for ho in range(H):
                        hi = ho - ph + kh
                        if hi < 0 or hi >= H:
                            continue
                        for wo in range(W):
                            wi = wo - pw + kw
                            if wi < 0 or wi >= W:
                                continue
                            M[ci * H * W + hi * W + wi,
                              co * H * W + ho * W + wo] += w[co, ci, kh, kw]
    b = np.zeros((cols_pad,), np.float32)
    b[:Cout * H * W] = np.repeat(np.asarray(bias, np.float32), H * W)
    return jnp.asarray(M, dtype=jnp.bfloat16), jnp.asarray(b)


def pad_lane(v, n):
    out = np.zeros((n,), np.float32)
    flat = np.asarray(v, np.float32).reshape(-1)
    out[:flat.size] = flat
    return jnp.asarray(out)


def res_layer_forward(x_nchw, m1p, b1f, g1f, be1f, m2p, b2f, g2f, be2f, H, W, cout,
                      out_dtype=jnp.bfloat16):
    N, Cin, _, _ = x_nchw.shape
    D0, D1 = Cin * H * W, cout * H * W
    D0p, D1p = m1p.shape
    assert m2p.shape == (D1p, D1p)

    TM = _choose_tm(N)                              # sublane-aligned row tile
    Np = _round_up(N, TM)                           # pad batch rows

    # lane/sublane zero-padded activation built directly in bf16 (half the
    # wrapper-side HBM traffic vs. materializing an f32 slab first).
    x_flat = jnp.pad(x_nchw.reshape(N, D0).astype(jnp.bfloat16),
                     ((0, Np - N), (0, D0p - D0)))

    # pack the six affine vectors into one (8, D1p) slab -> single DMA
    aff = jnp.zeros((8, D1p), jnp.float32)
    aff = aff.at[0, :].set(b1f).at[1, :].set(g1f).at[2, :].set(be1f)
    aff = aff.at[3, :].set(b2f).at[4, :].set(g2f).at[5, :].set(be2f)

    kernel = functools.partial(res_layer_kernel, inv_d=1.0 / float(D1))

    def build(single_buffer_weights):
        # Grid-invariant operands: request single-buffering (halves their VMEM
        # reservation); Pallas already skips the re-fetch for a constant
        # index_map, so this is purely a VMEM-footprint win.
        resident = ({"pipeline_mode": pl.Buffered(1)}
                    if single_buffer_weights else {})
        return pl.pallas_call(
            kernel,
            out_shape=jax.ShapeDtypeStruct((Np, D1p), out_dtype),
            grid=(Np // TM,),
            in_specs=[
                pl.BlockSpec((TM, D0p), lambda i: (i, 0)),              # x rows stream
                pl.BlockSpec((D0p, D1p), lambda i: (0, 0), **resident),  # M1 resident
                pl.BlockSpec((D1p, D1p), lambda i: (0, 0), **resident),  # M2 resident
                pl.BlockSpec((8, D1p), lambda i: (0, 0), **resident),    # affine slab
            ],
            out_specs=pl.BlockSpec((TM, D1p), lambda i: (i, 0)),
            compiler_params=pltpu.CompilerParams(
                dimension_semantics=("parallel",),      # megacore sharding on v7x
                vmem_limit_bytes=32 * 1024 * 1024,
            ),
        )

    try:
        out_pad = build(True)(x_flat, m1p, m2p, aff)
    except Exception:
        # pipeline_mode / Buffered(1) not supported on this jax version:
        # fall back to default double-buffering (correctness identical).
        out_pad = build(False)(x_flat, m1p, m2p, aff)

    return out_pad[:N, :D1].reshape(N, cout, H, W)


# ----- pure-JAX reference (mirrors PyTorch ResLayer semantics, NCHW) -----
def reference(x, w1, b1c, w2, b2c, g1, be1, g2, be2):
    def conv(x, w, b):
        ph, pw = w.shape[2] // 2, w.shape[3] // 2
        y = lax.conv_general_dilated(
            x, w, (1, 1), ((ph, ph), (pw, pw)),
            dimension_numbers=('NCHW', 'OIHW', 'NCHW'),
            precision=lax.Precision.HIGHEST)
        return y + b[None, :, None, None]

    def ln(x, g, be):
        mu = jnp.mean(x, axis=(1, 2, 3), keepdims=True)
        var = jnp.mean((x - mu) ** 2, axis=(1, 2, 3), keepdims=True)
        return (x - mu) * lax.rsqrt(var + EPS) * g[None] + be[None]

    h = ln(conv(x, w1, b1c), g1, be1)
    y = ln(conv(h, w2, b2c), g2, be2)
    s = h + y
    return jnp.where(s >= 0, s, NEG_SLOPE * s)


if __name__ == "__main__":
    # Small shapes consistent with the module: ResLayer(inp=2, out=8, 5, 5)
    # on NCHW input (2, 2, 7, 6); LayerNorm normalizes over [out, 7, 6].
    N, Cin, Cout, H, W, K = 2, 2, 8, 7, 6, 5
    D0, D1 = Cin * H * W, Cout * H * W
    D0p, D1p = _round_up(D0, LANE), _round_up(D1, LANE)   # 84->128, 336->384

    key = jax.random.PRNGKey(0)
    k_x, k_w1, k_b1, k_w2, k_b2, k_x2 = jax.random.split(key, 6)

    def init_conv(kw, kb, cout, cin, k):
        bound = 1.0 / np.sqrt(cin * k * k)
        w = jax.random.uniform(kw, (cout, cin, k, k), jnp.float32, -bound, bound)
        b = jax.random.uniform(kb, (cout,), jnp.float32, -bound, bound)
        return w, b

    w1, b1c = init_conv(k_w1, k_b1, Cout, Cin, K)
    w2, b2c = init_conv(k_w2, k_b2, Cout, Cout, K)
    # nn.LayerNorm default affine params: weight = 1, bias = 0, shape [out, H, W]
    g1 = jnp.ones((Cout, H, W), jnp.float32)
    be1 = jnp.zeros((Cout, H, W), jnp.float32)
    g2 = jnp.ones((Cout, H, W), jnp.float32)
    be2 = jnp.zeros((Cout, H, W), jnp.float32)

    # Glue: convs -> zero-padded Toeplitz matmul form (bf16); affine -> padded lanes
    M1, b1f = conv_to_matmul(w1, b1c, H, W, D0p, D1p)
    M2, b2f = conv_to_matmul(w2, b2c, H, W, D1p, D1p)
    g1f, be1f = pad_lane(g1, D1p), pad_lane(be1, D1p)
    g2f, be2f = pad_lane(g2, D1p), pad_lane(be2, D1p)

    # Padded-lane invariant: unmasked LayerNorm relies on padded output lanes
    # being exact zeros (zero Toeplitz columns + zero-padded affine vectors).
    assert not np.any(np.asarray(M1).astype(np.float32)[:, D1:])
    assert not np.any(np.asarray(M2).astype(np.float32)[:, D1:])
    for v in (b1f, g1f, be1f, b2f, g2f, be2f):
        assert not np.any(np.asarray(v)[D1:])

    def check(x):
        out = res_layer_forward(x, M1, b1f, g1f, be1f, M2, b2f, g2f, be2f,
                                H, W, Cout)
        out = jax.block_until_ready(out)
        ref = jax.block_until_ready(reference(x, w1, b1c, w2, b2c, g1, be1, g2, be2))
        assert out.shape == ref.shape
        # Tolerance sized for bf16 MXU operands + bf16 output store
        # (f32 accumulation, f32 LayerNorm / activation math).
        assert np.allclose(np.asarray(out.astype(jnp.float32)), np.asarray(ref),
                           atol=4e-2, rtol=2e-2), \
            "Pallas ResLayer output mismatch vs reference"

    # 1) Toy batch from the module spec (grid of 1, TM=8).
    check(jax.random.normal(k_x, (N, Cin, H, W), jnp.float32))
    # 2) Larger batch exercising the bigger row tile + multi-step parallel grid.
    check(jax.random.normal(k_x2, (64, Cin, H, W), jnp.float32))

    print("KERNEL_OK")
</pallas_src>

<mosaic_0001>
module attributes {stable_mosaic.version = 11 : i64} {
  func.func @res_layer_kernel(%arg0: i32, %arg1: memref<8x128xbf16, #tpu.memory_space<vmem>>, %arg2: memref<128x384xbf16, #tpu.memory_space<vmem>>, %arg3: memref<384x384xbf16, #tpu.memory_space<vmem>>, %arg4: memref<8x384xf32, #tpu.memory_space<vmem>>, %arg5: memref<8x384xbf16, #tpu.memory_space<vmem>>) attributes {dimension_semantics = [#tpu.dimension_semantics<parallel>], iteration_bounds = array<i64: 1>, scalar_prefetch = 0 : i64, scratch_operands = 0 : i64, tpu.core_type = #tpu.core_type<tc>, window_params = [{transform_indices = @transform_0, window_bounds = array<i64: 8, 128>}, {pipeline_mode = #tpu.pipeline_mode<synchronous>, transform_indices = @transform_1, window_bounds = array<i64: 128, 384>}, {pipeline_mode = #tpu.pipeline_mode<synchronous>, transform_indices = @transform_2, window_bounds = array<i64: 384, 384>}, {pipeline_mode = #tpu.pipeline_mode<synchronous>, transform_indices = @transform_3, window_bounds = array<i64: 8, 384>}, {transform_indices = @transform_4, window_bounds = array<i64: 8, 384>}]} {
    %c0 = arith.constant 0 : index
    %c0_0 = arith.constant 0 : index
    %0 = vector.load %arg4[%c0, %c0_0] : memref<8x384xf32, #tpu.memory_space<vmem>>, vector<8x384xf32>
    %1 = vector.extract_strided_slice %0 {offsets = [0, 0], sizes = [1, 384], strides = [1, 1]} : vector<8x384xf32> to vector<1x384xf32>
    %2 = vector.extract_strided_slice %0 {offsets = [1, 0], sizes = [1, 384], strides = [1, 1]} : vector<8x384xf32> to vector<1x384xf32>
    %3 = vector.extract_strided_slice %0 {offsets = [2, 0], sizes = [1, 384], strides = [1, 1]} : vector<8x384xf32> to vector<1x384xf32>
    %4 = vector.extract_strided_slice %0 {offsets = [3, 0], sizes = [1, 384], strides = [1, 1]} : vector<8x384xf32> to vector<1x384xf32>
    %5 = vector.extract_strided_slice %0 {offsets = [4, 0], sizes = [1, 384], strides = [1, 1]} : vector<8x384xf32> to vector<1x384xf32>
    %6 = vector.extract_strided_slice %0 {offsets = [5, 0], sizes = [1, 384], strides = [1, 1]} : vector<8x384xf32> to vector<1x384xf32>
    %c0_1 = arith.constant 0 : index
    %c0_2 = arith.constant 0 : index
    %7 = vector.load %arg1[%c0_1, %c0_2] : memref<8x128xbf16, #tpu.memory_space<vmem>>, vector<8x128xbf16>
    %c0_3 = arith.constant 0 : index
    %c0_4 = arith.constant 0 : index
    %8 = vector.load %arg2[%c0_3, %c0_4] : memref<128x384xbf16, #tpu.memory_space<vmem>>, vector<128x384xbf16>
    %cst = arith.constant dense<0.000000e+00> : vector<8x384xf32>
    %9 = tpu.matmul %7, %8, %cst {dimension_numbers = #tpu.dot_dimension_numbers<[1], [0], [0], [1], [0, 0, 1, 1], [], []>} : vector<8x128xbf16>, vector<128x384xbf16>, vector<8x384xf32> -> vector<8x384xf32>
    %10 = vector.broadcast %1 : vector<1x384xf32> to vector<8x384xf32>
    %11 = arith.addf %9, %10 : vector<8x384xf32>
    %cst_5 = arith.constant dense<0.000000e+00> : vector<8xf32>
    %12 = vector.multi_reduction <add>, %11, %cst_5 [1] : vector<8x384xf32> to vector<8xf32>
    %13 = vector.shape_cast %12 : vector<8xf32> to vector<8x1xf32>
    %cst_6 = arith.constant 0.00297619053 : f32
    %14 = vector.broadcast %cst_6 : f32 to vector<8x1xf32>
    %15 = arith.mulf %13, %14 : vector<8x1xf32>
    %16 = arith.mulf %11, %11 : vector<8x384xf32>
    %cst_7 = arith.constant dense<0.000000e+00> : vector<8xf32>
    %17 = vector.multi_reduction <add>, %16, %cst_7 [1] : vector<8x384xf32> to vector<8xf32>
    %18 = vector.shape_cast %17 : vector<8xf32> to vector<8x1xf32>
    %cst_8 = arith.constant 0.00297619053 : f32
    %19 = vector.broadcast %cst_8 : f32 to vector<8x1xf32>
    %20 = arith.mulf %18, %19 : vector<8x1xf32>
    %21 = arith.mulf %15, %15 : vector<8x1xf32>
    %22 = arith.subf %20, %21 : vector<8x1xf32>
    %cst_9 = arith.constant 0.000000e+00 : f32
    %23 = vector.broadcast %cst_9 : f32 to vector<8x1xf32>
    %24 = arith.maximumf %22, %23 : vector<8x1xf32>
    %25 = vector.broadcast %15 : vector<8x1xf32> to vector<8x384xf32>
    %26 = arith.subf %11, %25 : vector<8x384xf32>
    %cst_10 = arith.constant 9.99999974E-6 : f32
    %27 = vector.broadcast %cst_10 : f32 to vector<8x1xf32>
    %28 = arith.addf %24, %27 : vector<8x1xf32>
    %29 = math.rsqrt %28 : vector<8x1xf32>
    %30 = vector.broadcast %29 : vector<8x1xf32> to vector<8x384xf32>
    %31 = arith.mulf %26, %30 : vector<8x384xf32>
    %32 = vector.broadcast %2 : vector<1x384xf32> to vector<8x384xf32>
    %33 = arith.mulf %31, %32 : vector<8x384xf32>
    %34 = vector.broadcast %3 : vector<1x384xf32> to vector<8x384xf32>
    %35 = arith.addf %33, %34 : vector<8x384xf32>
    %36 = arith.truncf %35 : vector<8x384xf32> to vector<8x384xbf16>
    %c0_11 = arith.constant 0 : index
    %c0_12 = arith.constant 0 : index
    %37 = vector.load %arg3[%c0_11, %c0_12] : memref<384x384xbf16, #tpu.memory_space<vmem>>, vector<384x384xbf16>
    %cst_13 = arith.constant dense<0.000000e+00> : vector<8x384xf32>
    %38 = tpu.matmul %36, %37, %cst_13 {dimension_numbers = #tpu.dot_dimension_numbers<[1], [0], [0], [1], [0, 0, 1, 1], [], []>} : vector<8x384xbf16>, vector<384x384xbf16>, vector<8x384xf32> -> vector<8x384xf32>
    %39 = vector.broadcast %4 : vector<1x384xf32> to vector<8x384xf32>
    %40 = arith.addf %38, %39 : vector<8x384xf32>
    %cst_14 = arith.constant dense<0.000000e+00> : vector<8xf32>
    %41 = vector.multi_reduction <add>, %40, %cst_14 [1] : vector<8x384xf32> to vector<8xf32>
    %42 = vector.shape_cast %41 : vector<8xf32> to vector<8x1xf32>
    %cst_15 = arith.constant 0.00297619053 : f32
    %43 = vector.broadcast %cst_15 : f32 to vector<8x1xf32>
    %44 = arith.mulf %42, %43 : vector<8x1xf32>
    %45 = arith.mulf %40, %40 : vector<8x384xf32>
    %cst_16 = arith.constant dense<0.000000e+00> : vector<8xf32>
    %46 = vector.multi_reduction <add>, %45, %cst_16 [1] : vector<8x384xf32> to vector<8xf32>
    %47 = vector.shape_cast %46 : vector<8xf32> to vector<8x1xf32>
    %cst_17 = arith.constant 0.00297619053 : f32
    %48 = vector.broadcast %cst_17 : f32 to vector<8x1xf32>
    %49 = arith.mulf %47, %48 : vector<8x1xf32>
    %50 = arith.mulf %44, %44 : vector<8x1xf32>
    %51 = arith.subf %49, %50 : vector<8x1xf32>
    %cst_18 = arith.constant 0.000000e+00 : f32
    %52 = vector.broadcast %cst_18 : f32 to vector<8x1xf32>
    %53 = arith.maximumf %51, %52 : vector<8x1xf32>
    %54 = vector.broadcast %44 : vector<8x1xf32> to vector<8x384xf32>
    %55 = arith.subf %40, %54 : vector<8x384xf32>
    %cst_19 = arith.constant 9.99999974E-6 : f32
    %56 = vector.broadcast %cst_19 : f32 to vector<8x1xf32>
    %57 = arith.addf %53, %56 : vector<8x1xf32>
    %58 = math.rsqrt %57 : vector<8x1xf32>
    %59 = vector.broadcast %58 : vector<8x1xf32> to vector<8x384xf32>
    %60 = arith.mulf %55, %59 : vector<8x384xf32>
    %61 = vector.broadcast %5 : vector<1x384xf32> to vector<8x384xf32>
    %62 = arith.mulf %60, %61 : vector<8x384xf32>
    %63 = vector.broadcast %6 : vector<1x384xf32> to vector<8x384xf32>
    %64 = arith.addf %62, %63 : vector<8x384xf32>
    %65 = arith.addf %35, %64 : vector<8x384xf32>
    %cst_20 = arith.constant 0.00999999977 : f32
    %66 = vector.broadcast %cst_20 : f32 to vector<8x384xf32>
    %67 = arith.mulf %66, %65 : vector<8x384xf32>
    %68 = arith.maximumf %65, %67 : vector<8x384xf32>
    %69 = arith.truncf %68 : vector<8x384xf32> to vector<8x384xbf16>
    %c0_21 = arith.constant 0 : index
    %c0_22 = arith.constant 0 : index
    %70 = vector.load %arg5[%c0_21, %c0_22] : memref<8x384xbf16, #tpu.memory_space<vmem>>, vector<8x384xbf16>
    tpu.vector_store %arg5[%c0_21, %c0_22], %69 {strides = array<i32>} : memref<8x384xbf16, #tpu.memory_space<vmem>>, vector<8x384xbf16>,
    return
  }
  func.func @transform_0(%arg0: i32) -> (i32, i32) {
    %c0_i32 = arith.constant 0 : i32
    %c0_i32_0 = arith.constant 0 : i32
    return %arg0, %c0_i32 : i32, i32
  }
  func.func @transform_1(%arg0: i32) -> (i32, i32) {
    %c0_i32 = arith.constant 0 : i32
    %c0_i32_0 = arith.constant 0 : i32
    %c0_i32_1 = arith.constant 0 : i32
    return %c0_i32, %c0_i32_0 : i32, i32
  }
  func.func @transform_2(%arg0: i32) -> (i32, i32) {
    %c0_i32 = arith.constant 0 : i32
    %c0_i32_0 = arith.constant 0 : i32
    %c0_i32_1 = arith.constant 0 : i32
    return %c0_i32, %c0_i32_0 : i32, i32
  }
  func.func @transform_3(%arg0: i32) -> (i32, i32) {
    %c0_i32 = arith.constant 0 : i32
    %c0_i32_0 = arith.constant 0 : i32
    %c0_i32_1 = arith.constant 0 : i32
    return %c0_i32, %c0_i32_0 : i32, i32
  }
  func.func @transform_4(%arg0: i32) -> (i32, i32) {
    %c0_i32 = arith.constant 0 : i32
    %c0_i32_0 = arith.constant 0 : i32
    return %arg0, %c0_i32 : i32, i32
  }
}

module attributes {stable_mosaic.version = 11 : i64} {
  func.func @res_layer_kernel(%arg0: i32, %arg1: memref<8x128xbf16, #tpu.memory_space<vmem>>, %arg2: memref<128x384xbf16, #tpu.memory_space<vmem>>, %arg3: memref<384x384xbf16, #tpu.memory_space<vmem>>, %arg4: memref<8x384xf32, #tpu.memory_space<vmem>>, %arg5: memref<8x384xbf16, #tpu.memory_space<vmem>>) attributes {dimension_semantics = [#tpu.dimension_semantics<parallel>], iteration_bounds = array<i64: 1>, scalar_prefetch = 0 : i64, scratch_operands = 0 : i64, tpu.core_type = #tpu.core_type<tc>, window_params = [{transform_indices = @transform_0, window_bounds = array<i64: 8, 128>}, {pipeline_mode = #tpu.pipeline_mode<synchronous>, transform_indices = @transform_1, window_bounds = array<i64: 128, 384>}, {pipeline_mode = #tpu.pipeline_mode<synchronous>, transform_indices = @transform_2, window_bounds = array<i64: 384, 384>}, {pipeline_mode = #tpu.pipeline_mode<synchronous>, transform_indices = @transform_3, window_bounds = array<i64: 8, 384>}, {transform_indices = @transform_4, window_bounds = array<i64: 8, 384>}]} {
    %c0 = arith.constant 0 : index
    %c0_0 = arith.constant 0 : index
    %0 = vector.load %arg4[%c0, %c0_0] : memref<8x384xf32, #tpu.memory_space<vmem>>, vector<8x384xf32>
    %1 = vector.extract_strided_slice %0 {offsets = [0, 0], sizes = [1, 384], strides = [1, 1]} : vector<8x384xf32> to vector<1x384xf32>
    %2 = vector.extract_strided_slice %0 {offsets = [1, 0], sizes = [1, 384], strides = [1, 1]} : vector<8x384xf32> to vector<1x384xf32>
    %3 = vector.extract_strided_slice %0 {offsets = [2, 0], sizes = [1, 384], strides = [1, 1]} : vector<8x384xf32> to vector<1x384xf32>
    %4 = vector.extract_strided_slice %0 {offsets = [3, 0], sizes = [1, 384], strides = [1, 1]} : vector<8x384xf32> to vector<1x384xf32>
    %5 = vector.extract_strided_slice %0 {offsets = [4, 0], sizes = [1, 384], strides = [1, 1]} : vector<8x384xf32> to vector<1x384xf32>
    %6 = vector.extract_strided_slice %0 {offsets = [5, 0], sizes = [1, 384], strides = [1, 1]} : vector<8x384xf32> to vector<1x384xf32>
    %c0_1 = arith.constant 0 : index
    %c0_2 = arith.constant 0 : index
    %7 = vector.load %arg1[%c0_1, %c0_2] : memref<8x128xbf16, #tpu.memory_space<vmem>>, vector<8x128xbf16>
    %c0_3 = arith.constant 0 : index
    %c0_4 = arith.constant 0 : index
    %8 = vector.load %arg2[%c0_3, %c0_4] : memref<128x384xbf16, #tpu.memory_space<vmem>>, vector<128x384xbf16>
    %cst = arith.constant dense<0.000000e+00> : vector<8x384xf32>
    %9 = tpu.matmul %7, %8, %cst {dimension_numbers = #tpu.dot_dimension_numbers<[1], [0], [0], [1], [0, 0, 1, 1], [], []>} : vector<8x128xbf16>, vector<128x384xbf16>, vector<8x384xf32> -> vector<8x384xf32>
    %10 = vector.broadcast %1 : vector<1x384xf32> to vector<8x384xf32>
    %11 = arith.addf %9, %10 : vector<8x384xf32>
    %cst_5 = arith.constant dense<0.000000e+00> : vector<8xf32>
    %12 = vector.multi_reduction <add>, %11, %cst_5 [1] : vector<8x384xf32> to vector<8xf32>
    %13 = vector.shape_cast %12 : vector<8xf32> to vector<8x1xf32>
    %cst_6 = arith.constant 0.00297619053 : f32
    %14 = vector.broadcast %cst_6 : f32 to vector<8x1xf32>
    %15 = arith.mulf %13, %14 : vector<8x1xf32>
    %16 = arith.mulf %11, %11 : vector<8x384xf32>
    %cst_7 = arith.constant dense<0.000000e+00> : vector<8xf32>
    %17 = vector.multi_reduction <add>, %16, %cst_7 [1] : vector<8x384xf32> to vector<8xf32>
    %18 = vector.shape_cast %17 : vector<8xf32> to vector<8x1xf32>
    %cst_8 = arith.constant 0.00297619053 : f32
    %19 = vector.broadcast %cst_8 : f32 to vector<8x1xf32>
    %20 = arith.mulf %18, %19 : vector<8x1xf32>
    %21 = arith.mulf %15, %15 : vector<8x1xf32>
    %22 = arith.subf %20, %21 : vector<8x1xf32>
    %cst_9 = arith.constant 0.000000e+00 : f32
    %23 = vector.broadcast %cst_9 : f32 to vector<8x1xf32>
    %24 = arith.maximumf %22, %23 : vector<8x1xf32>
    %25 = vector.broadcast %15 : vector<8x1xf32> to vector<8x384xf32>
    %26 = arith.subf %11, %25 : vector<8x384xf32>
    %cst_10 = arith.constant 9.99999974E-6 : f32
    %27 = vector.broadcast %cst_10 : f32 to vector<8x1xf32>
    %28 = arith.addf %24, %27 : vector<8x1xf32>
    %29 = math.rsqrt %28 : vector<8x1xf32>
    %30 = vector.broadcast %29 : vector<8x1xf32> to vector<8x384xf32>
    %31 = arith.mulf %26, %30 : vector<8x384xf32>
    %32 = vector.broadcast %2 : vector<1x384xf32> to vector<8x384xf32>
    %33 = arith.mulf %31, %32 : vector<8x384xf32>
    %34 = vector.broadcast %3 : vector<1x384xf32> to vector<8x384xf32>
    %35 = arith.addf %33, %34 : vector<8x384xf32>
    %36 = arith.truncf %35 : vector<8x384xf32> to vector<8x384xbf16>
    %c0_11 = arith.constant 0 : index
    %c0_12 = arith.constant 0 : index
    %37 = vector.load %arg3[%c0_11, %c0_12] : memref<384x384xbf16, #tpu.memory_space<vmem>>, vector<384x384xbf16>
    %cst_13 = arith.constant dense<0.000000e+00> : vector<8x384xf32>
    %38 = tpu.matmul %36, %37, %cst_13 {dimension_numbers = #tpu.dot_dimension_numbers<[1], [0], [0], [1], [0, 0, 1, 1], [], []>} : vector<8x384xbf16>, vector<384x384xbf16>, vector<8x384xf32> -> vector<8x384xf32>
    %39 = vector.broadcast %4 : vector<1x384xf32> to vector<8x384xf32>
    %40 = arith.addf %38, %39 : vector<8x384xf32>
    %cst_14 = arith.constant dense<0.000000e+00> : vector<8xf32>
    %41 = vector.multi_reduction <add>, %40, %cst_14 [1] : vector<8x384xf32> to vector<8xf32>
    %42 = vector.shape_cast %41 : vector<8xf32> to vector<8x1xf32>
    %cst_15 = arith.constant 0.00297619053 : f32
    %43 = vector.broadcast %cst_15 : f32 to vector<8x1xf32>
    %44 = arith.mulf %42, %43 : vector<8x1xf32>
    %45 = arith.mulf %40, %40 : vector<8x384xf32>
    %cst_16 = arith.constant dense<0.000000e+00> : vector<8xf32>
    %46 = vector.multi_reduction <add>, %45, %cst_16 [1] : vector<8x384xf32> to vector<8xf32>
    %47 = vector.shape_cast %46 : vector<8xf32> to vector<8x1xf32>
    %cst_17 = arith.constant 0.00297619053 : f32
    %48 = vector.broadcast %cst_17 : f32 to vector<8x1xf32>
    %49 = arith.mulf %47, %48 : vector<8x1xf32>
    %50 = arith.mulf %44, %44 : vector<8x1xf32>
    %51 = arith.subf %49, %50 : vector<8x1xf32>
    %cst_18 = arith.constant 0.000000e+00 : f32
    %52 = vector.broadcast %cst_18 : f32 to vector<8x1xf32>
    %53 = arith.maximumf %51, %52 : vector<8x1xf32>
    %54 = vector.broadcast %44 : vector<8x1xf32> to vector<8x384xf32>
    %55 = arith.subf %40, %54 : vector<8x384xf32>
    %cst_19 = arith.constant 9.99999974E-6 : f32
    %56 = vector.broadcast %cst_19 : f32 to vector<8x1xf32>
    %57 = arith.addf %53, %56 : vector<8x1xf32>
    %58 = math.rsqrt %57 : vector<8x1xf32>
    %59 = vector.broadcast %58 : vector<8x1xf32> to vector<8x384xf32>
    %60 = arith.mulf %55, %59 : vector<8x384xf32>
    %61 = vector.broadcast %5 : vector<1x384xf32> to vector<8x384xf32>
    %62 = arith.mulf %60, %61 : vector<8x384xf32>
    %63 = vector.broadcast %6 : vector<1x384xf32> to vector<8x384xf32>
    %64 = arith.addf %62, %63 : vector<8x384xf32>
    %65 = arith.addf %35, %64 : vector<8x384xf32>
    %cst_20 = arith.constant 0.00999999977 : f32
    %66 = vector.broadcast %cst_20 : f32 to vector<8x384xf32>
    %67 = arith.mulf %66, %65 : vector<8x384xf32>
    %68 = arith.maximumf %65, %67 : vector<8x384xf32>
    %69 = arith.truncf %68 : vector<8x384xf32> to vector<8x384xbf16>
    %c0_21 = arith.constant 0 : index
    %c0_22 = arith.constant 0 : index
    %70 = vector.load %arg5[%c0_21, %c0_22] : memref<8x384xbf16, #tpu.memory_space<vmem>>, vector<8x384xbf16>
    tpu.vector_store %arg5[%c0_21, %c0_22], %69 {strides = array<i32>} : memref<8x384xbf16, #tpu.memory_space<vmem>>, vector<8x384xbf16>,
    return
  }
  func.func @transform_0(%arg0: i32) -> (i32, i32) {
    %c0_i32 = arith.constant 0 : i32
    %c0_i32_0 = arith.constant 0 : i32
    return %arg0, %c0_i32 : i32, i32
  }
  func.func @transform_1(%arg0: i32) -> (i32, i32) {
    %c0_i32 = arith.constant 0 : i32
    %c0_i32_0 = arith.constant 0 : i32
    %c0_i32_1 = arith.constant 0 : i32
    return %c0_i32, %c0_i32_0 : i32, i32
  }
  func.func @transform_2(%arg0: i32) -> (i32, i32) {
    %c0_i32 = arith.constant 0 : i32
    %c0_i32_0 = arith.constant 0 : i32
    %c0_i32_1 = arith.constant 0 : i32
    return %c0_i32, %c0_i32_0 : i32, i32
  }
  func.func @transform_3(%arg0: i32) -> (i32, i32) {
    %c0_i32 = arith.constant 0 : i32
    %c0_i32_0 = arith.constant 0 : i32
    %c0_i32_1 = arith.constant 0 : i32
    return %c0_i32, %c0_i32_0 : i32, i32
  }
  func.func @transform_4(%arg0: i32) -> (i32, i32) {
    %c0_i32 = arith.constant 0 : i32
    %c0_i32_0 = arith.constant 0 : i32
    return %arg0, %c0_i32 : i32, i32
  }
}

</mosaic_0001>

<llo_original>
// kernel: tpu_custom_call.1
$region0: #{tpu_custom_call.1}
  #allocation0 [shape = 'u32[]', space=smem, size = 0x4, offset = 0x4, fixed_abs, tag = 'smem constant byte address 0x4 - core index']
  #allocation1 [shape = 'u32[72,128]{1,0:T(1,128)}', space=vmem, size = 0x9000, scoped, tag = 'internal scratch']
  %s0 = inlined_call_operand.hbm [shape: bf16[8,128], index: 0, kind: input, shape index: {}]
  %s1 = inlined_call_operand.hbm [shape: bf16[128,384], index: 1, kind: input, shape index: {}]
  %s2 = inlined_call_operand.hbm [shape: bf16[384,384], index: 2, kind: input, shape index: {}]
  %s3 = inlined_call_operand.hbm [shape: f32[8,384], index: 3, kind: input, shape index: {}]
  %s4 = inlined_call_operand.hbm [shape: bf16[8,384], index: 4, kind: output, shape index: {}]
  %s5 = sld [smem:[#allocation0]]
  $region42: #{tpu_custom_call.1} parent=0
    _
  %s7 = ssub.s32 1, %s5
  %s8 = scalar_select 0, %s7, %s5
  $region1: #{tpu_custom_call.1} parent=0
    #allocation2 [shape = 'u8[2048]{0}', space=vmem, size = 0x800, scoped, tag = 'input window, operand 0, single buffered']
    #allocation3 [shape = 's32[1]{0}', space=sflag, size = 0x4, scoped, tag = 'scoped memory for tpu_custom_call.1']
    #allocation4 [shape = 's32[1]{0}', space=sflag, size = 0x4, scoped, tag = 'scoped memory for tpu_custom_call.1']
    #allocation5 [shape = 'u8[98304]{0}', space=vmem, size = 0x18000, scoped, tag = 'input window, operand 1, single buffered']
    #allocation6 [shape = 's32[1]{0}', space=sflag, size = 0x4, scoped, tag = 'scoped memory for tpu_custom_call.1']
    #allocation7 [shape = 'u8[294912]{0}', space=vmem, size = 0x48000, scoped, tag = 'input window, operand 2, single buffered']
    #allocation8 [shape = 'u8[12288]{0}', space=vmem, size = 0x3000, scoped, tag = 'input window, operand 3, single buffered']
    #allocation9 [shape = 's32[1]{0}', space=sflag, size = 0x4, scoped, tag = 'scoped memory for tpu_custom_call.1']
    #allocation10 [shape = 'u8[6144]{0}', space=vmem, size = 0x1800, scoped, tag = 'output window, operand 0, single buffered']
    %9 = vsyncpa [#allocation3], 0
    %10 = vsyncpa [#allocation6], 0
    %11 = vsyncpa [#allocation9], 0
    %12 = vsyncpa [#allocation4], 0
    // Predicated region
    $region2: #{tpu_custom_call.1} parent=1 // pred_check
      _
    $region3: #{tpu_custom_call.1} parent=1 // pred_check_branch
      %14 = sbr.rel (0) target = $region5
    $region4: #{tpu_custom_call.1} parent=1 // pred_region
      %16 = vsyncadd [#allocation3], 0
      %s18 = sshll.u32 %s0, 4
      %s19 = int_to_ptr.hbm [resolvable:$true] %s18
      %s20 = sshll.u32 [#allocation2], 4
      %s21 = int_to_ptr.vmem [resolvable:$true] %s20
      %23 = dma.hbm_to_vmem [thread:$0]  %s19, 64, %s21, [#allocation3]
    $region5: #{tpu_custom_call.1} parent=1 // pred_fallthru
      _
    // Predicated region
    $region6: #{tpu_custom_call.1} parent=1 // pred_check
      _
    $region7: #{tpu_custom_call.1} parent=1 // pred_check_branch
      %25 = sbr.rel (0) target = $region9
    $region8: #{tpu_custom_call.1} parent=1 // pred_region
      %27 = vsyncadd [#allocation6], 0
      %s28 = sshll.u32 %s1, 4
      %s29 = int_to_ptr.hbm [resolvable:$true] %s28
      %s30 = sshll.u32 [#allocation5], 4
      %s31 = int_to_ptr.vmem [resolvable:$true] %s30
      %36 = dma.hbm_to_vmem [thread:$0]  %s29, 3072, %s31, [#allocation6], 192, 192, 12
    $region9: #{tpu_custom_call.1} parent=1 // pred_fallthru
      _
    // Predicated region
    $region10: #{tpu_custom_call.1} parent=1 // pred_check
      _
    $region11: #{tpu_custom_call.1} parent=1 // pred_check_branch
      %38 = sbr.rel (0) target = $region13
    $region12: #{tpu_custom_call.1} parent=1 // pred_region
      %40 = vsyncadd [#allocation6], 0
      %s41 = sshll.u32 %s2, 4
      %s42 = int_to_ptr.hbm [resolvable:$true] %s41
      %s43 = sshll.u32 [#allocation7], 4
      %s44 = int_to_ptr.vmem [resolvable:$true] %s43
      %49 = dma.hbm_to_vmem [thread:$0]  %s42, 9216, %s44, [#allocation6], 192, 192, 12
    $region13: #{tpu_custom_call.1} parent=1 // pred_fallthru
      _
    // Predicated region
    $region14: #{tpu_custom_call.1} parent=1 // pred_check
      _
    $region15: #{tpu_custom_call.1} parent=1 // pred_check_branch
      %51 = sbr.rel (0) target = $region17
    $region16: #{tpu_custom_call.1} parent=1 // pred_region
      %53 = vsyncadd [#allocation9], 0
      %s55 = sshll.u32 %s3, 4
      %s56 = int_to_ptr.hbm [resolvable:$true] %s55
      %s57 = sshll.u32 [#allocation8], 4
      %s58 = int_to_ptr.vmem [resolvable:$true] %s57
      %60 = dma.hbm_to_vmem [thread:$0]  %s56, 384, %s58, [#allocation9]
    $region17: #{tpu_custom_call.1} parent=1 // pred_fallthru
      _
    // Predicated region
    $region18: #{tpu_custom_call.1} parent=1 // pred_check
      _
    $region19: #{tpu_custom_call.1} parent=1 // pred_check_branch
      %62 = sbr.rel (0) target = $region21
    $region20: #{tpu_custom_call.1} parent=1 // pred_region
      %64 = dma.done [#allocation3], 64
    $region21: #{tpu_custom_call.1} parent=1 // pred_fallthru
      _
    // Predicated region
    $region22: #{tpu_custom_call.1} parent=1 // pred_check
      _
    $region23: #{tpu_custom_call.1} parent=1 // pred_check_branch
      %66 = sbr.rel (0) target = $region25
    $region24: #{tpu_custom_call.1} parent=1 // pred_region
      %68 = dma.done [#allocation6], 3072
    $region25: #{tpu_custom_call.1} parent=1 // pred_fallthru
      _
    // Predicated region
    $region26: #{tpu_custom_call.1} parent=1 // pred_check
      _
    $region27: #{tpu_custom_call.1} parent=1 // pred_check_branch
      %70 = sbr.rel (0) target = $region29
    $region28: #{tpu_custom_call.1} parent=1 // pred_region
      %72 = dma.done [#allocation6], 9216
    $region29: #{tpu_custom_call.1} parent=1 // pred_fallthru
      _
    // Predicated region
    $region30: #{tpu_custom_call.1} parent=1 // pred_check
      _
    $region31: #{tpu_custom_call.1} parent=1 // pred_check_branch
      %74 = sbr.rel (0) target = $region33
    $region32: #{tpu_custom_call.1} parent=1 // pred_region
      %76 = dma.done [#allocation9], 384
    $region33: #{tpu_custom_call.1} parent=1 // pred_fallthru
      _
    %v77 = vld [vmem:[#allocation8] sm:$0xff]
    %v78 = vld [vmem:[#allocation8 + $0x8] sm:$0xff]
    %v79 = vld [vmem:[#allocation8 + $0x10] sm:$0xff]
    %v80 = vld [vmem:[#allocation2] sm:$0xf]
    %v81 = vld [vmem:[#allocation5] sm:$0xff]
    %v82 = vld [vmem:[#allocation5 + $0x8] sm:$0xf]
    %v83 = vld [vmem:[#allocation5 + $0xc] sm:$0xff]
    %v84 = vld [vmem:[#allocation5 + $0x14] sm:$0xf]
    %v85 = vld [vmem:[#allocation5 + $0x18] sm:$0xff]
    %v86 = vld [vmem:[#allocation5 + $0x20] sm:$0xf]
    %v87 = vld [vmem:[#allocation5 + $0x24] sm:$0xff]
    %v88 = vld [vmem:[#allocation5 + $0x2c] sm:$0xf]
    %v89 = vld [vmem:[#allocation5 + $0x30] sm:$0xff]
    %v90 = vld [vmem:[#allocation5 + $0x38] sm:$0xf]
    %v91 = vld [vmem:[#allocation5 + $0x3c] sm:$0xff]
    %v92 = vld [vmem:[#allocation5 + $0x44] sm:$0xf]
    %v93 = vld [vmem:[#allocation5 + $0x48] sm:$0xff]
    %v94 = vld [vmem:[#allocation5 + $0x50] sm:$0xf]
    %v95 = vld [vmem:[#allocation5 + $0x54] sm:$0xff]
    %v96 = vld [vmem:[#allocation5 + $0x5c] sm:$0xf]
    %v97 = vld [vmem:[#allocation5 + $0x60] sm:$0xff]
    %v98 = vld [vmem:[#allocation5 + $0x68] sm:$0xf]
    %v99 = vld [vmem:[#allocation5 + $0x6c] sm:$0xff]
    %v100 = vld [vmem:[#allocation5 + $0x74] sm:$0xf]
    %v101 = vld [vmem:[#allocation5 + $0x78] sm:$0xff]
    %v102 = vld [vmem:[#allocation5 + $0x80] sm:$0xf]
    %v103 = vld [vmem:[#allocation5 + $0x84] sm:$0xff]
    %v104 = vld [vmem:[#allocation5 + $0x8c] sm:$0xf]
    %v105 = vld [vmem:[#allocation5 + $0x90] sm:$0xff]
    %v106 = vld [vmem:[#allocation5 + $0x98] sm:$0xf]
    %v107 = vld [vmem:[#allocation5 + $0x9c] sm:$0xff]
    %v108 = vld [vmem:[#allocation5 + $0xa4] sm:$0xf]
    %v109 = vld [vmem:[#allocation5 + $0xa8] sm:$0xff]
    %v110 = vld [vmem:[#allocation5 + $0xb0] sm:$0xf]
    %v111 = vld [vmem:[#allocation5 + $0xb4] sm:$0xff]
    %v112 = vld [vmem:[#allocation5 + $0xbc] sm:$0xf]
    %v113 = vperm.slane %v77, 0
    %v114 = vperm.slane %v78, 0
    %v115 = vperm.slane %v79, 0
    %v148 = vunpack.c.l.b16 %v81
    %v149 = vunpack.c.h.b16 %v81
    %v150 = vunpack.c.l.b16 %v82
    %v151 = vunpack.c.l.b16 %v83
    %v152 = vunpack.c.h.b16 %v83
    %v153 = vunpack.c.l.b16 %v84
    %v154 = vunpack.c.l.b16 %v85
    %v155 = vunpack.c.h.b16 %v85
    %v156 = vunpack.c.l.b16 %v86
    %v157 = vunpack.c.l.b16 %v87
    %v158 = vunpack.c.h.b16 %v87
    %v159 = vunpack.c.l.b16 %v88
    %v160 = vunpack.c.l.b16 %v89
    %v161 = vunpack.c.h.b16 %v89
    %v162 = vunpack.c.l.b16 %v90
    %v163 = vunpack.c.l.b16 %v91
    %v164 = vunpack.c.h.b16 %v91
    %v165 = vunpack.c.l.b16 %v92
    %v166 = vunpack.c.l.b16 %v93
    %v167 = vunpack.c.h.b16 %v93
    %v168 = vunpack.c.l.b16 %v94
    %v169 = vunpack.c.l.b16 %v95
    %v170 = vunpack.c.h.b16 %v95
    %v171 = vunpack.c.l.b16 %v96
    %v172 = vunpack.c.l.b16 %v97
    %v173 = vunpack.c.h.b16 %v97
    %v174 = vunpack.c.l.b16 %v98
    %v175 = vunpack.c.l.b16 %v99
    %v176 = vunpack.c.h.b16 %v99
    %v177 = vunpack.c.l.b16 %v100
    %v178 = vunpack.c.l.b16 %v101
    %v179 = vunpack.c.h.b16 %v101
    %v180 = vunpack.c.l.b16 %v102
    %v181 = vunpack.c.l.b16 %v103
    %v182 = vunpack.c.h.b16 %v103
    %v183 = vunpack.c.l.b16 %v104
    %v184 = vunpack.c.l.b16 %v105
    %v185 = vunpack.c.h.b16 %v105
    %v186 = vunpack.c.l.b16 %v106
    %v187 = vunpack.c.l.b16 %v107
    %v188 = vunpack.c.h.b16 %v107
    %v189 = vunpack.c.l.b16 %v108
    %v190 = vunpack.c.l.b16 %v109
    %v191 = vunpack.c.h.b16 %v109
    %v192 = vunpack.c.l.b16 %v110
    %v193 = vunpack.c.l.b16 %v111
    %v194 = vunpack.c.h.b16 %v111
    %v195 = vunpack.c.l.b16 %v112
    %v196 = vpack.c.b16 %v151, %v148
    %v197 = vpack.c.b16 %v152, %v149
    %v198 = vpack.c.b16 %v153, %v150
    %v199 = vpack.c.b16 %v157, %v154
    %v200 = vpack.c.b16 %v158, %v155
    %v201 = vpack.c.b16 %v159, %v156
    %v202 = vpack.c.b16 %v163, %v160
    %v203 = vpack.c.b16 %v164, %v161
    %v204 = vpack.c.b16 %v165, %v162
    %v205 = vpack.c.b16 %v169, %v166
    %v206 = vpack.c.b16 %v170, %v167
    %v207 = vpack.c.b16 %v171, %v168
    %v208 = vpack.c.b16 %v175, %v172
    %v209 = vpack.c.b16 %v176, %v173
    %v210 = vpack.c.b16 %v177, %v174
    %v211 = vpack.c.b16 %v181, %v178
    %v212 = vpack.c.b16 %v182, %v179
    %v213 = vpack.c.b16 %v183, %v180
    %v214 = vpack.c.b16 %v187, %v184
    %v215 = vpack.c.b16 %v188, %v185
    %v216 = vpack.c.b16 %v189, %v186
    %v217 = vpack.c.b16 %v193, %v190
    %v218 = vpack.c.b16 %v194, %v191
    %v219 = vpack.c.b16 %v195, %v192
    %244 = vmatpush.bf16.msra.mxu0 %v217
    %245 = vmatpush.bf16.msra.mxu0 %v214
    %246 = vmatpush.bf16.msra.mxu0 %v211
    %247 = vmatpush.bf16.msra.mxu0 %v208
    %248 = vmatpush.bf16.msra.mxu0 %v205
    %249 = vmatpush.bf16.msra.mxu0 %v202
    %250 = vmatpush.bf16.msra.mxu0 %v199
    %251 = vmatpush.bf16.msra.mxu0 %v196
    %252 = vmatmul.bf16.gmra.mxu0 %v80
    %v253 = vpop.f32.mrf.mxu0
    %v254 = vadd.f32 %v113, %v253
    %v255 = vpop.f32.mrf.mxu0
    %256 = vdwg.mxu0
    %257 = vmatpush.bf16.msra.mxu0 %v218
    %258 = vmatpush.bf16.msra.mxu0 %v215
    %259 = vmatpush.bf16.msra.mxu0 %v212
    %260 = vmatpush.bf16.msra.mxu0 %v209
    %261 = vmatpush.bf16.msra.mxu0 %v206
    %262 = vmatpush.bf16.msra.mxu0 %v203
    %263 = vmatpush.bf16.msra.mxu0 %v200
    %264 = vmatpush.bf16.msra.mxu0 %v197
    %265 = vmatmul.bf16.gmra.mxu0 %v80
    %v266 = vpop.f32.mrf.mxu0
    %v267 = vadd.f32 %v114, %v266
    %v268 = vpop.f32.mrf.mxu0
    %269 = vdwg.mxu0
    %270 = vmatpush.bf16.msra.mxu0 %v219
    %271 = vmatpush.bf16.msra.mxu0 %v216
    %272 = vmatpush.bf16.msra.mxu0 %v213
    %273 = vmatpush.bf16.msra.mxu0 %v210
    %274 = vmatpush.bf16.msra.mxu0 %v207
    %275 = vmatpush.bf16.msra.mxu0 %v204
    %276 = vmatpush.bf16.msra.mxu0 %v201
    %277 = vmatpush.bf16.msra.mxu0 %v198
    %278 = vmatmul.bf16.gmra.mxu0 %v80
    %v279 = vpop.f32.mrf.mxu0
    %v280 = vadd.f32 %v115, %v279
    %v281 = vpop.f32.mrf.mxu0
    %282 = vdwg.mxu0
    %v283 = vadd.f32 %v254, %v267
    %v284 = vadd.f32 %v283, %v280
    %285 = vadd.xlane.f32.xlu0 %v284
    %v286 = vpop.xlane.xlu0 %285
    %v287 = vmul.f32 %v286, 0.0029761905
    %v288 = vmul.f32 %v254, %v254
    %v289 = vmul.f32 %v267, %v267
    %v290 = vmul.f32 %v280, %v280
    %v291 = vadd.f32 %v288, %v289
    %v292 = vadd.f32 %v291, %v290
    %293 = vadd.xlane.f32.xlu0 %v292
    %v294 = vpop.xlane.xlu0 %293
    %v295 = vmul.f32 %v294, 0.0029761905
    %v296 = vmul.f32 %v287, %v287
    %v297 = vsub.f32 %v295, %v296
    %v298 = vmax.f32 %v297, 0.0
    %v299 = vsub.f32 %v254, %v287
    %v300 = vsub.f32 %v267, %v287
    %v301 = vsub.f32 %v280, %v287
    %v302 = vadd.f32 %v298, 1e-05
    %v303 = vrsqrt.pop %v302
    %v304 = vmul.f32 %v303, %v302
    %v305 = vmul.f32 %v304, %v303
    %v306 = vmul.f32 0.5, %v305
    %v307 = vsub.f32 1.5, %v306
    %v308 = vmul.f32 %v303, %v307
    %vm309 = vweird.f32 %v302
    %vm310 = vweird.f32 %v303
    %vm311 = vmor %vm309, %vm310
    %v312 = vsel %vm311, %v303, %v308
    %v313 = vmul.f32 %v299, %v312
    %v314 = vmul.f32 %v300, %v312
    %v315 = vmul.f32 %v301, %v312
    %v316 = vperm.slane %v77, 1
    %v317 = vperm.slane %v78, 1
    %v318 = vperm.slane %v79, 1
    %v319 = vmul.f32 %v313, %v316
    %v320 = vmul.f32 %v314, %v317
    %v321 = vmul.f32 %v315, %v318
    %v322 = vperm.slane %v77, 2
    %v323 = vperm.slane %v78, 2
    %v324 = vperm.slane %v79, 2
    %v325 = vadd.f32 %v319, %v322
    %v326 = vadd.f32 %v320, %v323
    %v327 = vadd.f32 %v321, %v324
    %v328 = vpack.c.bf16 %v325, %v325
    %v329 = vpack.c.bf16 %v326, %v326
    %v330 = vpack.c.bf16 %v327, %v327
    %v331 = vld [vmem:[#allocation7] sm:$0xff]
    %v332 = vld [vmem:[#allocation7 + $0x8] sm:$0xf]
    %v333 = vld [vmem:[#allocation7 + $0xc] sm:$0xff]
    %v334 = vld [vmem:[#allocation7 + $0x14] sm:$0xf]
    %v335 = vld [vmem:[#allocation7 + $0x18] sm:$0xff]
    %v336 = vld [vmem:[#allocation7 + $0x20] sm:$0xf]
    %v337 = vld [vmem:[#allocation7 + $0x24] sm:$0xff]
    %v338 = vld [vmem:[#allocation7 + $0x2c] sm:$0xf]
    %v339 = vld [vmem:[#allocation7 + $0x30] sm:$0xff]
    %v340 = vld [vmem:[#allocation7 + $0x38] sm:$0xf]
    %v341 = vld [vmem:[#allocation7 + $0x3c] sm:$0xff]
    %v342 = vld [vmem:[#allocation7 + $0x44] sm:$0xf]
    %v343 = vld [vmem:[#allocation7 + $0x48] sm:$0xff]
    %v344 = vld [vmem:[#allocation7 + $0x50] sm:$0xf]
    %v345 = vld [vmem:[#allocation7 + $0x54] sm:$0xff]
    %v346 = vld [vmem:[#allocation7 + $0x5c] sm:$0xf]
    %v347 = vld [vmem:[#allocation7 + $0x60] sm:$0xff]
    %v348 = vld [vmem:[#allocation7 + $0x68] sm:$0xf]
    %v349 = vld [vmem:[#allocation7 + $0x6c] sm:$0xff]
    %v350 = vld [vmem:[#allocation7 + $0x74] sm:$0xf]
    %v351 = vld [vmem:[#allocation7 + $0x78] sm:$0xff]
    %v352 = vld [vmem:[#allocation7 + $0x80] sm:$0xf]
    %v353 = vld [vmem:[#allocation7 + $0x84] sm:$0xff]
    %v354 = vld [vmem:[#allocation7 + $0x8c] sm:$0xf]
    %v355 = vld [vmem:[#allocation7 + $0x90] sm:$0xff]
    %v356 = vld [vmem:[#allocation7 + $0x98] sm:$0xf]
    %v357 = vld [vmem:[#allocation7 + $0x9c] sm:$0xff]
    %v358 = vld [vmem:[#allocation7 + $0xa4] sm:$0xf]
    %v359 = vld [vmem:[#allocation7 + $0xa8] sm:$0xff]
    %v360 = vld [vmem:[#allocation7 + $0xb0] sm:$0xf]
    %v361 = vld [vmem:[#allocation7 + $0xb4] sm:$0xff]
    %v362 = vld [vmem:[#allocation7 + $0xbc] sm:$0xf]
    %v363 = vld [vmem:[#allocation7 + $0xc0] sm:$0xff]
    %v364 = vld [vmem:[#allocation7 + $0xc8] sm:$0xf]
    %v365 = vld [vmem:[#allocation7 + $0xcc] sm:$0xff]
    %v366 = vld [vmem:[#allocation7 + $0xd4] sm:$0xf]
    %v367 = vld [vmem:[#allocation7 + $0xd8] sm:$0xff]
    %v368 = vld [vmem:[#allocation7 + $0xe0] sm:$0xf]
    %v369 = vld [vmem:[#allocation7 + $0xe4] sm:$0xff]
    %v370 = vld [vmem:[#allocation7 + $0xec] sm:$0xf]
    %v371 = vld [vmem:[#allocation7 + $0xf0] sm:$0xff]
    %v372 = vld [vmem:[#allocation7 + $0xf8] sm:$0xf]
    %v373 = vld [vmem:[#allocation7 + $0xfc] sm:$0xff]
    %v374 = vld [vmem:[#allocation7 + $0x104] sm:$0xf]
    %v375 = vld [vmem:[#allocation7 + $0x108] sm:$0xff]
    %v376 = vld [vmem:[#allocation7 + $0x110] sm:$0xf]
    %v377 = vld [vmem:[#allocation7 + $0x114] sm:$0xff]
    %v378 = vld [vmem:[#allocation7 + $0x11c] sm:$0xf]
    %v379 = vld [vmem:[#allocation7 + $0x120] sm:$0xff]
    %v380 = vld [vmem:[#allocation7 + $0x128] sm:$0xf]
    %v381 = vld [vmem:[#allocation7 + $0x12c] sm:$0xff]
    %v382 = vld [vmem:[#allocation7 + $0x134] sm:$0xf]
    %v383 = vld [vmem:[#allocation7 + $0x138] sm:$0xff]
    %v384 = vld [vmem:[#allocation7 + $0x140] sm:$0xf]
    %v385 = vld [vmem:[#allocation7 + $0x144] sm:$0xff]
    %v386 = vld [vmem:[#allocation7 + $0x14c] sm:$0xf]
    %v387 = vld [vmem:[#allocation7 + $0x150] sm:$0xff]
    %v388 = vld [vmem:[#allocation7 + $0x158] sm:$0xf]
    %v389 = vld [vmem:[#allocation7 + $0x15c] sm:$0xff]
    %v390 = vld [vmem:[#allocation7 + $0x164] sm:$0xf]
    %v391 = vld [vmem:[#allocation7 + $0x168] sm:$0xff]
    %v392 = vld [vmem:[#allocation7 + $0x170] sm:$0xf]
    %v393 = vld [vmem:[#allocation7 + $0x174] sm:$0xff]
    %v394 = vld [vmem:[#allocation7 + $0x17c] sm:$0xf]
    %v395 = vld [vmem:[#allocation7 + $0x180] sm:$0xff]
    %v396 = vld [vmem:[#allocation7 + $0x188] sm:$0xf]
    %v397 = vld [vmem:[#allocation7 + $0x18c] sm:$0xff]
    %v398 = vld [vmem:[#allocation7 + $0x194] sm:$0xf]
    %v399 = vld [vmem:[#allocation7 + $0x198] sm:$0xff]
    %v400 = vld [vmem:[#allocation7 + $0x1a0] sm:$0xf]
    %v401 = vld [vmem:[#allocation7 + $0x1a4] sm:$0xff]
    %v402 = vld [vmem:[#allocation7 + $0x1ac] sm:$0xf]
    %v403 = vld [vmem:[#allocation7 + $0x1b0] sm:$0xff]
    %v404 = vld [vmem:[#allocation7 + $0x1b8] sm:$0xf]
    %v405 = vld [vmem:[#allocation7 + $0x1bc] sm:$0xff]
    %v406 = vld [vmem:[#allocation7 + $0x1c4] sm:$0xf]
    %v407 = vld [vmem:[#allocation7 + $0x1c8] sm:$0xff]
    %v408 = vld [vmem:[#allocation7 + $0x1d0] sm:$0xf]
    %v409 = vld [vmem:[#allocation7 + $0x1d4] sm:$0xff]
    %v410 = vld [vmem:[#allocation7 + $0x1dc] sm:$0xf]
    %v411 = vld [vmem:[#allocation7 + $0x1e0] sm:$0xff]
    %v412 = vld [vmem:[#allocation7 + $0x1e8] sm:$0xf]
    %v413 = vld [vmem:[#allocation7 + $0x1ec] sm:$0xff]
    %v414 = vld [vmem:[#allocation7 + $0x1f4] sm:$0xf]
    %v415 = vld [vmem:[#allocation7 + $0x1f8] sm:$0xff]
    %v416 = vld [vmem:[#allocation7 + $0x200] sm:$0xf]
    %v417 = vld [vmem:[#allocation7 + $0x204] sm:$0xff]
    %v418 = vld [vmem:[#allocation7 + $0x20c] sm:$0xf]
    %v419 = vld [vmem:[#allocation7 + $0x210] sm:$0xff]
    %v420 = vld [vmem:[#allocation7 + $0x218] sm:$0xf]
    %v421 = vld [vmem:[#allocation7 + $0x21c] sm:$0xff]
    %v422 = vld [vmem:[#allocation7 + $0x224] sm:$0xf]
    %v423 = vld [vmem:[#allocation7 + $0x228] sm:$0xff]
    %v424 = vld [vmem:[#allocation7 + $0x230] sm:$0xf]
    %v425 = vld [vmem:[#allocation7 + $0x234] sm:$0xff]
    %v426 = vld [vmem:[#allocation7 + $0x23c] sm:$0xf]
    %v427 = vperm.slane %v77, 3
    %v428 = vperm.slane %v78, 3
    %v429 = vperm.slane %v79, 3
    %v526 = vunpack.c.l.b16 %v331
    %v527 = vunpack.c.h.b16 %v331
    %v528 = vunpack.c.l.b16 %v332
    %v529 = vunpack.c.l.b16 %v333
    %v530 = vunpack.c.h.b16 %v333
    %v531 = vunpack.c.l.b16 %v334
    %v532 = vunpack.c.l.b16 %v335
    %v533 = vunpack.c.h.b16 %v335
    %v534 = vunpack.c.l.b16 %v336
    %v535 = vunpack.c.l.b16 %v337
    %v536 = vunpack.c.h.b16 %v337
    %v537 = vunpack.c.l.b16 %v338
    %v538 = vunpack.c.l.b16 %v339
    %v539 = vunpack.c.h.b16 %v339
    %v540 = vunpack.c.l.b16 %v340
    %v541 = vunpack.c.l.b16 %v341
    %v542 = vunpack.c.h.b16 %v341
    %v543 = vunpack.c.l.b16 %v342
    %v544 = vunpack.c.l.b16 %v343
    %v545 = vunpack.c.h.b16 %v343
    %v546 = vunpack.c.l.b16 %v344
    %v547 = vunpack.c.l.b16 %v345
    %v548 = vunpack.c.h.b16 %v345
    %v549 = vunpack.c.l.b16 %v346
    %v550 = vunpack.c.l.b16 %v347
    %v551 = vunpack.c.h.b16 %v347
    %v552 = vunpack.c.l.b16 %v348
    %v553 = vunpack.c.l.b16 %v349
    %v554 = vunpack.c.h.b16 %v349
    %v555 = vunpack.c.l.b16 %v350
    %v556 = vunpack.c.l.b16 %v351
    %v557 = vunpack.c.h.b16 %v351
    %v558 = vunpack.c.l.b16 %v352
    %v559 = vunpack.c.l.b16 %v353
    %v560 = vunpack.c.h.b16 %v353
    %v561 = vunpack.c.l.b16 %v354
    %v562 = vunpack.c.l.b16 %v355
    %v563 = vunpack.c.h.b16 %v355
    %v564 = vunpack.c.l.b16 %v356
    %v565 = vunpack.c.l.b16 %v357
    %v566 = vunpack.c.h.b16 %v357
    %v567 = vunpack.c.l.b16 %v358
    %v568 = vunpack.c.l.b16 %v359
    %v569 = vunpack.c.h.b16 %v359
    %v570 = vunpack.c.l.b16 %v360
    %v571 = vunpack.c.l.b16 %v361
    %v572 = vunpack.c.h.b16 %v361
    %v573 = vunpack.c.l.b16 %v362
    %v574 = vunpack.c.l.b16 %v363
    %v575 = vunpack.c.h.b16 %v363
    %v576 = vunpack.c.l.b16 %v364
    %v577 = vunpack.c.l.b16 %v365
    %v578 = vunpack.c.h.b16 %v365
    %v579 = vunpack.c.l.b16 %v366
    %v580 = vunpack.c.l.b16 %v367
    %v581 = vunpack.c.h.b16 %v367
    %v582 = vunpack.c.l.b16 %v368
    %v583 = vunpack.c.l.b16 %v369
    %v584 = vunpack.c.h.b16 %v369
    %v585 = vunpack.c.l.b16 %v370
    %v586 = vunpack.c.l.b16 %v371
    %v587 = vunpack.c.h.b16 %v371
    %v588 = vunpack.c.l.b16 %v372
    %v589 = vunpack.c.l.b16 %v373
    %v590 = vunpack.c.h.b16 %v373
    %v591 = vunpack.c.l.b16 %v374
    %v592 = vunpack.c.l.b16 %v375
    %v593 = vunpack.c.h.b16 %v375
    %v594 = vunpack.c.l.b16 %v376
    %v595 = vunpack.c.l.b16 %v377
    %v596 = vunpack.c.h.b16 %v377
    %v597 = vunpack.c.l.b16 %v378
    %v598 = vunpack.c.l.b16 %v379
    %v599 = vunpack.c.h.b16 %v379
    %v600 = vunpack.c.l.b16 %v380
    %v601 = vunpack.c.l.b16 %v381
    %v602 = vunpack.c.h.b16 %v381
    %v603 = vunpack.c.l.b16 %v382
    %v604 = vunpack.c.l.b16 %v383
    %v605 = vunpack.c.h.b16 %v383
    %v606 = vunpack.c.l.b16 %v384
    %v607 = vunpack.c.l.b16 %v385
    %v608 = vunpack.c.h.b16 %v385
    %v609 = vunpack.c.l.b16 %v386
    %v610 = vunpack.c.l.b16 %v387
    %v611 = vunpack.c.h.b16 %v387
    %v612 = vunpack.c.l.b16 %v388
    %v613 = vunpack.c.l.b16 %v389
    %v614 = vunpack.c.h.b16 %v389
    %v615 = vunpack.c.l.b16 %v390
    %v616 = vunpack.c.l.b16 %v391
    %v617 = vunpack.c.h.b16 %v391
    %v618 = vunpack.c.l.b16 %v392
    %v619 = vunpack.c.l.b16 %v393
    %v620 = vunpack.c.h.b16 %v393
    %v621 = vunpack.c.l.b16 %v394
    %v622 = vunpack.c.l.b16 %v395
    %v623 = vunpack.c.h.b16 %v395
    %v624 = vunpack.c.l.b16 %v396
    %v625 = vunpack.c.l.b16 %v397
    %v626 = vunpack.c.h.b16 %v397
    %v627 = vunpack.c.l.b16 %v398
    %v628 = vunpack.c.l.b16 %v399
    %v629 = vunpack.c.h.b16 %v399
    %v630 = vunpack.c.l.b16 %v400
    %v631 = vunpack.c.l.b16 %v401
    %v632 = vunpack.c.h.b16 %v401
    %v633 = vunpack.c.l.b16 %v402
    %v634 = vunpack.c.l.b16 %v403
    %v635 = vunpack.c.h.b16 %v403
    %v636 = vunpack.c.l.b16 %v404
    %v637 = vunpack.c.l.b16 %v405
    %v638 = vunpack.c.h.b16 %v405
    %v639 = vunpack.c.l.b16 %v406
    %v640 = vunpack.c.l.b16 %v407
    %v641 = vunpack.c.h.b16 %v407
    %v642 = vunpack.c.l.b16 %v408
    %v643 = vunpack.c.l.b16 %v409
    %v644 = vunpack.c.h.b16 %v409
    %v645 = vunpack.c.l.b16 %v410
    %v646 = vunpack.c.l.b16 %v411
    %v647 = vunpack.c.h.b16 %v411
    %v648 = vunpack.c.l.b16 %v412
    %v649 = vunpack.c.l.b16 %v413
    %v650 = vunpack.c.h.b16 %v413
    %v651 = vunpack.c.l.b16 %v414
    %v652 = vunpack.c.l.b16 %v415
    %v653 = vunpack.c.h.b16 %v415
    %v654 = vunpack.c.l.b16 %v416
    %v655 = vunpack.c.l.b16 %v417
    %v656 = vunpack.c.h.b16 %v417
    %v657 = vunpack.c.l.b16 %v418
    %v658 = vunpack.c.l.b16 %v419
    %v659 = vunpack.c.h.b16 %v419
    %v660 = vunpack.c.l.b16 %v420
    %v661 = vunpack.c.l.b16 %v421
    %v662 = vunpack.c.h.b16 %v421
    %v663 = vunpack.c.l.b16 %v422
    %v664 = vunpack.c.l.b16 %v423
    %v665 = vunpack.c.h.b16 %v423
    %v666 = vunpack.c.l.b16 %v424
    %v667 = vunpack.c.l.b16 %v425
    %v668 = vunpack.c.h.b16 %v425
    %v669 = vunpack.c.l.b16 %v426
    %v670 = vpack.c.b16 %v529, %v526
    %v671 = vpack.c.b16 %v530, %v527
    %v672 = vpack.c.b16 %v531, %v528
    %v673 = vpack.c.b16 %v535, %v532
    %v674 = vpack.c.b16 %v536, %v533
    %v675 = vpack.c.b16 %v537, %v534
    %v676 = vpack.c.b16 %v541, %v538
    %v677 = vpack.c.b16 %v542, %v539
    %v678 = vpack.c.b16 %v543, %v540
    %v679 = vpack.c.b16 %v547, %v544
    %v680 = vpack.c.b16 %v548, %v545
    %v681 = vpack.c.b16 %v549, %v546
    %v682 = vpack.c.b16 %v553, %v550
    %v683 = vpack.c.b16 %v554, %v551
    %v684 = vpack.c.b16 %v555, %v552
    %v685 = vpack.c.b16 %v559, %v556
    %v686 = vpack.c.b16 %v560, %v557
    %v687 = vpack.c.b16 %v561, %v558
    %v688 = vpack.c.b16 %v565, %v562
    %v689 = vpack.c.b16 %v566, %v563
    %v690 = vpack.c.b16 %v567, %v564
    %v691 = vpack.c.b16 %v571, %v568
    %v692 = vpack.c.b16 %v572, %v569
    %v693 = vpack.c.b16 %v573, %v570
    %v694 = vpack.c.b16 %v577, %v574
    %v695 = vpack.c.b16 %v578, %v575
    %v696 = vpack.c.b16 %v579, %v576
    %v697 = vpack.c.b16 %v583, %v580
    %v698 = vpack.c.b16 %v584, %v581
    %v699 = vpack.c.b16 %v585, %v582
    %v700 = vpack.c.b16 %v589, %v586
    %v701 = vpack.c.b16 %v590, %v587
    %v702 = vpack.c.b16 %v591, %v588
    %v703 = vpack.c.b16 %v595, %v592
    %v704 = vpack.c.b16 %v596, %v593
    %v705 = vpack.c.b16 %v597, %v594
    %v706 = vpack.c.b16 %v601, %v598
    %v707 = vpack.c.b16 %v602, %v599
    %v708 = vpack.c.b16 %v603, %v600
    %v709 = vpack.c.b16 %v607, %v604
    %v710 = vpack.c.b16 %v608, %v605
    %v711 = vpack.c.b16 %v609, %v606
    %v712 = vpack.c.b16 %v613, %v610
    %v713 = vpack.c.b16 %v614, %v611
    %v714 = vpack.c.b16 %v615, %v612
    %v715 = vpack.c.b16 %v619, %v616
    %v716 = vpack.c.b16 %v620, %v617
    %v717 = vpack.c.b16 %v621, %v618
    %v718 = vpack.c.b16 %v625, %v622
    %v719 = vpack.c.b16 %v626, %v623
    %v720 = vpack.c.b16 %v627, %v624
    %v721 = vpack.c.b16 %v631, %v628
    %v722 = vpack.c.b16 %v632, %v629
    %v723 = vpack.c.b16 %v633, %v630
    %v724 = vpack.c.b16 %v637, %v634
    %v725 = vpack.c.b16 %v638, %v635
    %v726 = vpack.c.b16 %v639, %v636
    %v727 = vpack.c.b16 %v643, %v640
    %v728 = vpack.c.b16 %v644, %v641
    %v729 = vpack.c.b16 %v645, %v642
    %v730 = vpack.c.b16 %v649, %v646
    %v731 = vpack.c.b16 %v650, %v647
    %v732 = vpack.c.b16 %v651, %v648
    %v733 = vpack.c.b16 %v655, %v652
    %v734 = vpack.c.b16 %v656, %v653
    %v735 = vpack.c.b16 %v657, %v654
    %v736 = vpack.c.b16 %v661, %v658
    %v737 = vpack.c.b16 %v662, %v659
    %v738 = vpack.c.b16 %v663, %v660
    %v739 = vpack.c.b16 %v667, %v664
    %v740 = vpack.c.b16 %v668, %v665
    %v741 = vpack.c.b16 %v669, %v666
    %814 = vmatpush.bf16.msra.mxu0 %v691
    %815 = vmatpush.bf16.msra.mxu0 %v688
    %816 = vmatpush.bf16.msra.mxu0 %v685
    %817 = vmatpush.bf16.msra.mxu0 %v682
    %818 = vmatpush.bf16.msra.mxu0 %v679
    %819 = vmatpush.bf16.msra.mxu0 %v676
    %820 = vmatpush.bf16.msra.mxu0 %v673
    %821 = vmatpush.bf16.msra.mxu0 %v670
    %822 = vmatmul.bf16.gmra.mxu0 %v328
    %v823 = vpop.f32.mrf.mxu0
    %v824 = vadd.f32 %v427, %v823
    %v825 = vpop.f32.mrf.mxu0
    %826 = vdwg.mxu0
    %827 = vmatpush.bf16.msra.mxu0 %v715
    %828 = vmatpush.bf16.msra.mxu0 %v712
    %829 = vmatpush.bf16.msra.mxu0 %v709
    %830 = vmatpush.bf16.msra.mxu0 %v706
    %831 = vmatpush.bf16.msra.mxu0 %v703
    %832 = vmatpush.bf16.msra.mxu0 %v700
    %833 = vmatpush.bf16.msra.mxu0 %v697
    %834 = vmatpush.bf16.msra.mxu0 %v694
    %835 = vmatmul.bf16.gmra.mxu0 %v329
    %v836 = vpop.f32.mrf.mxu0
    %v837 = vadd.f32 %v824, %v836
    %v838 = vpop.f32.mrf.mxu0
    %839 = vdwg.mxu0
    %840 = vmatpush.bf16.msra.mxu0 %v739
    %841 = vmatpush.bf16.msra.mxu0 %v736
    %842 = vmatpush.bf16.msra.mxu0 %v733
    %843 = vmatpush.bf16.msra.mxu0 %v730
    %844 = vmatpush.bf16.msra.mxu0 %v727
    %845 = vmatpush.bf16.msra.mxu0 %v724
    %846 = vmatpush.bf16.msra.mxu0 %v721
    %847 = vmatpush.bf16.msra.mxu0 %v718
    %848 = vmatmul.bf16.gmra.mxu0 %v330
    %v849 = vpop.f32.mrf.mxu0
    %v850 = vadd.f32 %v837, %v849
    %v851 = vpop.f32.mrf.mxu0
    %852 = vdwg.mxu0
    %853 = vmatpush.bf16.msra.mxu0 %v692
    %854 = vmatpush.bf16.msra.mxu0 %v689
    %855 = vmatpush.bf16.msra.mxu0 %v686
    %856 = vmatpush.bf16.msra.mxu0 %v683
    %857 = vmatpush.bf16.msra.mxu0 %v680
    %858 = vmatpush.bf16.msra.mxu0 %v677
    %859 = vmatpush.bf16.msra.mxu0 %v674
    %860 = vmatpush.bf16.msra.mxu0 %v671
    %861 = vmatmul.bf16.gmra.mxu0 %v328
    %v862 = vpop.f32.mrf.mxu0
    %v863 = vadd.f32 %v428, %v862
    %v864 = vpop.f32.mrf.mxu0
    %865 = vdwg.mxu0
    %866 = vmatpush.bf16.msra.mxu0 %v716
    %867 = vmatpush.bf16.msra.mxu0 %v713
    %868 = vmatpush.bf16.msra.mxu0 %v710
    %869 = vmatpush.bf16.msra.mxu0 %v707
    %870 = vmatpush.bf16.msra.mxu0 %v704
    %871 = vmatpush.bf16.msra.mxu0 %v701
    %872 = vmatpush.bf16.msra.mxu0 %v698
    %873 = vmatpush.bf16.msra.mxu0 %v695
    %874 = vmatmul.bf16.gmra.mxu0 %v329
    %v875 = vpop.f32.mrf.mxu0
    %v876 = vadd.f32 %v863, %v875
    %v877 = vpop.f32.mrf.mxu0
    %878 = vdwg.mxu0
    %879 = vmatpush.bf16.msra.mxu0 %v740
    %880 = vmatpush.bf16.msra.mxu0 %v737
    %881 = vmatpush.bf16.msra.mxu0 %v734
    %882 = vmatpush.bf16.msra.mxu0 %v731
    %883 = vmatpush.bf16.msra.mxu0 %v728
    %884 = vmatpush.bf16.msra.mxu0 %v725
    %885 = vmatpush.bf16.msra.mxu0 %v722
    %886 = vmatpush.bf16.msra.mxu0 %v719
    %887 = vmatmul.bf16.gmra.mxu0 %v330
    %v888 = vpop.f32.mrf.mxu0
    %v889 = vadd.f32 %v876, %v888
    %v890 = vpop.f32.mrf.mxu0
    %891 = vdwg.mxu0
    %892 = vmatpush.bf16.msra.mxu0 %v693
    %893 = vmatpush.bf16.msra.mxu0 %v690
    %894 = vmatpush.bf16.msra.mxu0 %v687
    %895 = vmatpush.bf16.msra.mxu0 %v684
    %896 = vmatpush.bf16.msra.mxu0 %v681
    %897 = vmatpush.bf16.msra.mxu0 %v678
    %898 = vmatpush.bf16.msra.mxu0 %v675
    %899 = vmatpush.bf16.msra.mxu0 %v672
    %900 = vmatmul.bf16.gmra.mxu0 %v328
    %v901 = vpop.f32.mrf.mxu0
    %v902 = vadd.f32 %v429, %v901
    %v903 = vpop.f32.mrf.mxu0
    %904 = vdwg.mxu0
    %905 = vmatpush.bf16.msra.mxu0 %v717
    %906 = vmatpush.bf16.msra.mxu0 %v714
    %907 = vmatpush.bf16.msra.mxu0 %v711
    %908 = vmatpush.bf16.msra.mxu0 %v708
    %909 = vmatpush.bf16.msra.mxu0 %v705
    %910 = vmatpush.bf16.msra.mxu0 %v702
    %911 = vmatpush.bf16.msra.mxu0 %v699
    %912 = vmatpush.bf16.msra.mxu0 %v696
    %913 = vmatmul.bf16.gmra.mxu0 %v329
    %v914 = vpop.f32.mrf.mxu0
    %v915 = vadd.f32 %v902, %v914
    %v916 = vpop.f32.mrf.mxu0
    %917 = vdwg.mxu0
    %918 = vmatpush.bf16.msra.mxu0 %v741
    %919 = vmatpush.bf16.msra.mxu0 %v738
    %920 = vmatpush.bf16.msra.mxu0 %v735
    %921 = vmatpush.bf16.msra.mxu0 %v732
    %922 = vmatpush.bf16.msra.mxu0 %v729
    %923 = vmatpush.bf16.msra.mxu0 %v726
    %924 = vmatpush.bf16.msra.mxu0 %v723
    %925 = vmatpush.bf16.msra.mxu0 %v720
    %926 = vmatmul.bf16.gmra.mxu0 %v330
    %v927 = vpop.f32.mrf.mxu0
    %v928 = vadd.f32 %v915, %v927
    %v929 = vpop.f32.mrf.mxu0
    %930 = vdwg.mxu0
    %v931 = vadd.f32 %v850, %v889
    %v932 = vadd.f32 %v931, %v928
    %933 = vadd.xlane.f32.xlu0 %v932
    %v934 = vpop.xlane.xlu0 %933
    %v935 = vmul.f32 %v934, 0.0029761905
    %v936 = vmul.f32 %v850, %v850
    %v937 = vmul.f32 %v889, %v889
    %v938 = vmul.f32 %v928, %v928
    %v939 = vadd.f32 %v936, %v937
    %v940 = vadd.f32 %v939, %v938
    %941 = vadd.xlane.f32.xlu0 %v940
    %v942 = vpop.xlane.xlu0 %941
    %v943 = vmul.f32 %v942, 0.0029761905
    %v944 = vmul.f32 %v935, %v935
    %v945 = vsub.f32 %v943, %v944
    %v946 = vmax.f32 %v945, 0.0
    %v947 = vsub.f32 %v850, %v935
    %v948 = vsub.f32 %v889, %v935
    %v949 = vsub.f32 %v928, %v935
    %v950 = vadd.f32 %v946, 1e-05
    %v951 = vrsqrt.pop %v950
    %v952 = vmul.f32 %v951, %v950
    %v953 = vmul.f32 %v952, %v951
    %v954 = vmul.f32 0.5, %v953
    %v955 = vsub.f32 1.5, %v954
    %v956 = vmul.f32 %v951, %v955
    %vm957 = vweird.f32 %v950
    %vm958 = vweird.f32 %v951
    %vm959 = vmor %vm957, %vm958
    %v960 = vsel %vm959, %v951, %v956
    %v961 = vmul.f32 %v947, %v960
    %v962 = vmul.f32 %v948, %v960
    %v963 = vmul.f32 %v949, %v960
    %v964 = vperm.slane %v77, 4
    %v965 = vperm.slane %v78, 4
    %v966 = vperm.slane %v79, 4
    %v967 = vmul.f32 %v961, %v964
    %v968 = vmul.f32 %v962, %v965
    %v969 = vmul.f32 %v963, %v966
    %v970 = vperm.slane %v77, 5
    %v971 = vperm.slane %v78, 5
    %v972 = vperm.slane %v79, 5
    %v973 = vadd.f32 %v967, %v970
    %v974 = vadd.f32 %v968, %v971
    %v975 = vadd.f32 %v969, %v972
    %v976 = vadd.f32 %v325, %v973
    %v977 = vadd.f32 %v326, %v974
    %v978 = vadd.f32 %v327, %v975
    %v979 = vmul.f32 %v976, 0.01
    %v980 = vmul.f32 %v977, 0.01
    %v981 = vmul.f32 %v978, 0.01
    %v982 = vmax.f32 %v976, %v979
    %v983 = vmax.f32 %v977, %v980
    %v984 = vmax.f32 %v978, %v981
    %v985 = vpack.c.bf16 %v983, %v982
    %v986 = vpack.c.bf16 %v984, %v984
    %987 = vst [vmem:[#allocation10] sm:$0xff] %v985
    %988 = vst [vmem:[#allocation10 + $0x8] sm:$0xf] %v986
    // Predicated region
    $region34: #{tpu_custom_call.1} parent=1 // pred_check
      _
    $region35: #{tpu_custom_call.1} parent=1 // pred_check_branch
      %990 = sbr.rel (0) target = $region37
    $region36: #{tpu_custom_call.1} parent=1 // pred_region
      %992 = vsyncadd [#allocation4], 0
      %s994 = sshll.u32 [#allocation10], 4
      %s995 = int_to_ptr.vmem [resolvable:$true] %s994
      %s996 = sshll.u32 %s4, 4
      %s997 = int_to_ptr.hbm [resolvable:$true] %s996
      %999 = dma.vmem_to_hbm [thread:$0]  %s995, 192, %s997, [#allocation4]
    $region37: #{tpu_custom_call.1} parent=1 // pred_fallthru
      _
    // Predicated region
    $region38: #{tpu_custom_call.1} parent=1 // pred_check
      _
    $region39: #{tpu_custom_call.1} parent=1 // pred_check_branch
      %1001 = sbr.rel (0) target = $region41
    $region40: #{tpu_custom_call.1} parent=1 // pred_region
      %1003 = dma.done [#allocation4], 192
    $region41: #{tpu_custom_call.1} parent=1 // pred_fallthru
      _
    %1004 = vsyncpa [#allocation3], 1
    %1005 = vsyncpa [#allocation6], 1
    %1006 = vsyncpa [#allocation9], 1
    %1007 = vsyncpa [#allocation4], 1

// kernel: tpu_custom_call.1
$region0: #{tpu_custom_call.1}
  #allocation0 [shape = 'u32[]', space=smem, size = 0x4, offset = 0x4, fixed_abs, tag = 'smem constant byte address 0x4 - core index']
  #allocation1 [shape = 'u32[72,128]{1,0:T(1,128)}', space=vmem, size = 0x9000, scoped, tag = 'internal scratch']
  %s0 = inlined_call_operand.hbm [shape: bf16[8,128], index: 0, kind: input, shape index: {}]
  %s1 = inlined_call_operand.hbm [shape: bf16[128,384], index: 1, kind: input, shape index: {}]
  %s2 = inlined_call_operand.hbm [shape: bf16[384,384], index: 2, kind: input, shape index: {}]
  %s3 = inlined_call_operand.hbm [shape: f32[8,384], index: 3, kind: input, shape index: {}]
  %s4 = inlined_call_operand.hbm [shape: bf16[8,384], index: 4, kind: output, shape index: {}]
  %s5 = sld [smem:[#allocation0]]
  $region42: #{tpu_custom_call.1} parent=0
    _
  %s7 = ssub.s32 1, %s5
  %s8 = scalar_select 0, %s7, %s5
  $region1: #{tpu_custom_call.1} parent=0
    #allocation2 [shape = 'u8[2048]{0}', space=vmem, size = 0x800, scoped, tag = 'input window, operand 0, single buffered']
    #allocation3 [shape = 's32[1]{0}', space=sflag, size = 0x4, scoped, tag = 'scoped memory for tpu_custom_call.1']
    #allocation4 [shape = 's32[1]{0}', space=sflag, size = 0x4, scoped, tag = 'scoped memory for tpu_custom_call.1']
    #allocation5 [shape = 'u8[98304]{0}', space=vmem, size = 0x18000, scoped, tag = 'input window, operand 1, single buffered']
    #allocation6 [shape = 's32[1]{0}', space=sflag, size = 0x4, scoped, tag = 'scoped memory for tpu_custom_call.1']
    #allocation7 [shape = 'u8[294912]{0}', space=vmem, size = 0x48000, scoped, tag = 'input window, operand 2, single buffered']
    #allocation8 [shape = 'u8[12288]{0}', space=vmem, size = 0x3000, scoped, tag = 'input window, operand 3, single buffered']
    #allocation9 [shape = 's32[1]{0}', space=sflag, size = 0x4, scoped, tag = 'scoped memory for tpu_custom_call.1']
    #allocation10 [shape = 'u8[6144]{0}', space=vmem, size = 0x1800, scoped, tag = 'output window, operand 0, single buffered']
    %9 = vsyncpa [#allocation3], 0
    %10 = vsyncpa [#allocation6], 0
    %11 = vsyncpa [#allocation9], 0
    %12 = vsyncpa [#allocation4], 0
    // Predicated region
    $region2: #{tpu_custom_call.1} parent=1 // pred_check
      _
    $region3: #{tpu_custom_call.1} parent=1 // pred_check_branch
      %14 = sbr.rel (0) target = $region5
    $region4: #{tpu_custom_call.1} parent=1 // pred_region
      %16 = vsyncadd [#allocation3], 0
      %s18 = sshll.u32 %s0, 4
      %s19 = int_to_ptr.hbm [resolvable:$true] %s18
      %s20 = sshll.u32 [#allocation2], 4
      %s21 = int_to_ptr.vmem [resolvable:$true] %s20
      %23 = dma.hbm_to_vmem [thread:$0]  %s19, 64, %s21, [#allocation3]
    $region5: #{tpu_custom_call.1} parent=1 // pred_fallthru
      _
    // Predicated region
    $region6: #{tpu_custom_call.1} parent=1 // pred_check
      _
    $region7: #{tpu_custom_call.1} parent=1 // pred_check_branch
      %25 = sbr.rel (0) target = $region9
    $region8: #{tpu_custom_call.1} parent=1 // pred_region
      %27 = vsyncadd [#allocation6], 0
      %s28 = sshll.u32 %s1, 4
      %s29 = int_to_ptr.hbm [resolvable:$true] %s28
      %s30 = sshll.u32 [#allocation5], 4
      %s31 = int_to_ptr.vmem [resolvable:$true] %s30
      %36 = dma.hbm_to_vmem [thread:$0]  %s29, 3072, %s31, [#allocation6], 192, 192, 12
    $region9: #{tpu_custom_call.1} parent=1 // pred_fallthru
      _
    // Predicated region
    $region10: #{tpu_custom_call.1} parent=1 // pred_check
      _
    $region11: #{tpu_custom_call.1} parent=1 // pred_check_branch
      %38 = sbr.rel (0) target = $region13
    $region12: #{tpu_custom_call.1} parent=1 // pred_region
      %40 = vsyncadd [#allocation6], 0
      %s41 = sshll.u32 %s2, 4
      %s42 = int_to_ptr.hbm [resolvable:$true] %s41
      %s43 = sshll.u32 [#allocation7], 4
      %s44 = int_to_ptr.vmem [resolvable:$true] %s43
      %49 = dma.hbm_to_vmem [thread:$0]  %s42, 9216, %s44, [#allocation6], 192, 192, 12
    $region13: #{tpu_custom_call.1} parent=1 // pred_fallthru
      _
    // Predicated region
    $region14: #{tpu_custom_call.1} parent=1 // pred_check
      _
    $region15: #{tpu_custom_call.1} parent=1 // pred_check_branch
      %51 = sbr.rel (0) target = $region17
    $region16: #{tpu_custom_call.1} parent=1 // pred_region
      %53 = vsyncadd [#allocation9], 0
      %s55 = sshll.u32 %s3, 4
      %s56 = int_to_ptr.hbm [resolvable:$true] %s55
      %s57 = sshll.u32 [#allocation8], 4
      %s58 = int_to_ptr.vmem [resolvable:$true] %s57
      %60 = dma.hbm_to_vmem [thread:$0]  %s56, 384, %s58, [#allocation9]
    $region17: #{tpu_custom_call.1} parent=1 // pred_fallthru
      _
    // Predicated region
    $region18: #{tpu_custom_call.1} parent=1 // pred_check
      _
    $region19: #{tpu_custom_call.1} parent=1 // pred_check_branch
      %62 = sbr.rel (0) target = $region21
    $region20: #{tpu_custom_call.1} parent=1 // pred_region
      %64 = dma.done [#allocation3], 64
    $region21: #{tpu_custom_call.1} parent=1 // pred_fallthru
      _
    // Predicated region
    $region22: #{tpu_custom_call.1} parent=1 // pred_check
      _
    $region23: #{tpu_custom_call.1} parent=1 // pred_check_branch
      %66 = sbr.rel (0) target = $region25
    $region24: #{tpu_custom_call.1} parent=1 // pred_region
      %68 = dma.done [#allocation6], 3072
    $region25: #{tpu_custom_call.1} parent=1 // pred_fallthru
      _
    // Predicated region
    $region26: #{tpu_custom_call.1} parent=1 // pred_check
      _
    $region27: #{tpu_custom_call.1} parent=1 // pred_check_branch
      %70 = sbr.rel (0) target = $region29
    $region28: #{tpu_custom_call.1} parent=1 // pred_region
      %72 = dma.done [#allocation6], 9216
    $region29: #{tpu_custom_call.1} parent=1 // pred_fallthru
      _
    // Predicated region
    $region30: #{tpu_custom_call.1} parent=1 // pred_check
      _
    $region31: #{tpu_custom_call.1} parent=1 // pred_check_branch
      %74 = sbr.rel (0) target = $region33
    $region32: #{tpu_custom_call.1} parent=1 // pred_region
      %76 = dma.done [#allocation9], 384
    $region33: #{tpu_custom_call.1} parent=1 // pred_fallthru
      _
    %v77 = vld [vmem:[#allocation8] sm:$0xff]
    %v78 = vld [vmem:[#allocation8 + $0x8] sm:$0xff]
    %v79 = vld [vmem:[#allocation8 + $0x10] sm:$0xff]
    %v80 = vld [vmem:[#allocation2] sm:$0xf]
    %v81 = vld [vmem:[#allocation5] sm:$0xff]
    %v82 = vld [vmem:[#allocation5 + $0x8] sm:$0xf]
    %v83 = vld [vmem:[#allocation5 + $0xc] sm:$0xff]
    %v84 = vld [vmem:[#allocation5 + $0x14] sm:$0xf]
    %v85 = vld [vmem:[#allocation5 + $0x18] sm:$0xff]
    %v86 = vld [vmem:[#allocation5 + $0x20] sm:$0xf]
    %v87 = vld [vmem:[#allocation5 + $0x24] sm:$0xff]
    %v88 = vld [vmem:[#allocation5 + $0x2c] sm:$0xf]
    %v89 = vld [vmem:[#allocation5 + $0x30] sm:$0xff]
    %v90 = vld [vmem:[#allocation5 + $0x38] sm:$0xf]
    %v91 = vld [vmem:[#allocation5 + $0x3c] sm:$0xff]
    %v92 = vld [vmem:[#allocation5 + $0x44] sm:$0xf]
    %v93 = vld [vmem:[#allocation5 + $0x48] sm:$0xff]
    %v94 = vld [vmem:[#allocation5 + $0x50] sm:$0xf]
    %v95 = vld [vmem:[#allocation5 + $0x54] sm:$0xff]
    %v96 = vld [vmem:[#allocation5 + $0x5c] sm:$0xf]
    %v97 = vld [vmem:[#allocation5 + $0x60] sm:$0xff]
    %v98 = vld [vmem:[#allocation5 + $0x68] sm:$0xf]
    %v99 = vld [vmem:[#allocation5 + $0x6c] sm:$0xff]
    %v100 = vld [vmem:[#allocation5 + $0x74] sm:$0xf]
    %v101 = vld [vmem:[#allocation5 + $0x78] sm:$0xff]
    %v102 = vld [vmem:[#allocation5 + $0x80] sm:$0xf]
    %v103 = vld [vmem:[#allocation5 + $0x84] sm:$0xff]
    %v104 = vld [vmem:[#allocation5 + $0x8c] sm:$0xf]
    %v105 = vld [vmem:[#allocation5 + $0x90] sm:$0xff]
    %v106 = vld [vmem:[#allocation5 + $0x98] sm:$0xf]
    %v107 = vld [vmem:[#allocation5 + $0x9c] sm:$0xff]
    %v108 = vld [vmem:[#allocation5 + $0xa4] sm:$0xf]
    %v109 = vld [vmem:[#allocation5 + $0xa8] sm:$0xff]
    %v110 = vld [vmem:[#allocation5 + $0xb0] sm:$0xf]
    %v111 = vld [vmem:[#allocation5 + $0xb4] sm:$0xff]
    %v112 = vld [vmem:[#allocation5 + $0xbc] sm:$0xf]
    %v113 = vperm.slane %v77, 0
    %v114 = vperm.slane %v78, 0
    %v115 = vperm.slane %v79, 0
    %v148 = vunpack.c.l.b16 %v81
    %v149 = vunpack.c.h.b16 %v81
    %v150 = vunpack.c.l.b16 %v82
    %v151 = vunpack.c.l.b16 %v83
    %v152 = vunpack.c.h.b16 %v83
    %v153 = vunpack.c.l.b16 %v84
    %v154 = vunpack.c.l.b16 %v85
    %v155 = vunpack.c.h.b16 %v85
    %v156 = vunpack.c.l.b16 %v86
    %v157 = vunpack.c.l.b16 %v87
    %v158 = vunpack.c.h.b16 %v87
    %v159 = vunpack.c.l.b16 %v88
    %v160 = vunpack.c.l.b16 %v89
    %v161 = vunpack.c.h.b16 %v89
    %v162 = vunpack.c.l.b16 %v90
    %v163 = vunpack.c.l.b16 %v91
    %v164 = vunpack.c.h.b16 %v91
    %v165 = vunpack.c.l.b16 %v92
    %v166 = vunpack.c.l.b16 %v93
    %v167 = vunpack.c.h.b16 %v93
    %v168 = vunpack.c.l.b16 %v94
    %v169 = vunpack.c.l.b16 %v95
    %v170 = vunpack.c.h.b16 %v95
    %v171 = vunpack.c.l.b16 %v96
    %v172 = vunpack.c.l.b16 %v97
    %v173 = vunpack.c.h.b16 %v97
    %v174 = vunpack.c.l.b16 %v98
    %v175 = vunpack.c.l.b16 %v99
    %v176 = vunpack.c.h.b16 %v99
    %v177 = vunpack.c.l.b16 %v100
    %v178 = vunpack.c.l.b16 %v101
    %v179 = vunpack.c.h.b16 %v101
    %v180 = vunpack.c.l.b16 %v102
    %v181 = vunpack.c.l.b16 %v103
    %v182 = vunpack.c.h.b16 %v103
    %v183 = vunpack.c.l.b16 %v104
    %v184 = vunpack.c.l.b16 %v105
    %v185 = vunpack.c.h.b16 %v105
    %v186 = vunpack.c.l.b16 %v106
    %v187 = vunpack.c.l.b16 %v107
    %v188 = vunpack.c.h.b16 %v107
    %v189 = vunpack.c.l.b16 %v108
    %v190 = vunpack.c.l.b16 %v109
    %v191 = vunpack.c.h.b16 %v109
    %v192 = vunpack.c.l.b16 %v110
    %v193 = vunpack.c.l.b16 %v111
    %v194 = vunpack.c.h.b16 %v111
    %v195 = vunpack.c.l.b16 %v112
    %v196 = vpack.c.b16 %v151, %v148
    %v197 = vpack.c.b16 %v152, %v149
    %v198 = vpack.c.b16 %v153, %v150
    %v199 = vpack.c.b16 %v157, %v154
    %v200 = vpack.c.b16 %v158, %v155
    %v201 = vpack.c.b16 %v159, %v156
    %v202 = vpack.c.b16 %v163, %v160
    %v203 = vpack.c.b16 %v164, %v161
    %v204 = vpack.c.b16 %v165, %v162
    %v205 = vpack.c.b16 %v169, %v166
    %v206 = vpack.c.b16 %v170, %v167
    %v207 = vpack.c.b16 %v171, %v168
    %v208 = vpack.c.b16 %v175, %v172
    %v209 = vpack.c.b16 %v176, %v173
    %v210 = vpack.c.b16 %v177, %v174
    %v211 = vpack.c.b16 %v181, %v178
    %v212 = vpack.c.b16 %v182, %v179
    %v213 = vpack.c.b16 %v183, %v180
    %v214 = vpack.c.b16 %v187, %v184
    %v215 = vpack.c.b16 %v188, %v185
    %v216 = vpack.c.b16 %v189, %v186
    %v217 = vpack.c.b16 %v193, %v190
    %v218 = vpack.c.b16 %v194, %v191
    %v219 = vpack.c.b16 %v195, %v192
    %244 = vmatpush.bf16.msra.mxu0 %v217
    %245 = vmatpush.bf16.msra.mxu0 %v214
    %246 = vmatpush.bf16.msra.mxu0 %v211
    %247 = vmatpush.bf16.msra.mxu0 %v208
    %248 = vmatpush.bf16.msra.mxu0 %v205
    %249 = vmatpush.bf16.msra.mxu0 %v202
    %250 = vmatpush.bf16.msra.mxu0 %v199
    %251 = vmatpush.bf16.msra.mxu0 %v196
    %252 = vmatmul.bf16.gmra.mxu0 %v80
    %v253 = vpop.f32.mrf.mxu0
    %v254 = vadd.f32 %v113, %v253
    %v255 = vpop.f32.mrf.mxu0
    %256 = vdwg.mxu0
    %257 = vmatpush.bf16.msra.mxu0 %v218
    %258 = vmatpush.bf16.msra.mxu0 %v215
    %259 = vmatpush.bf16.msra.mxu0 %v212
    %260 = vmatpush.bf16.msra.mxu0 %v209
    %261 = vmatpush.bf16.msra.mxu0 %v206
    %262 = vmatpush.bf16.msra.mxu0 %v203
    %263 = vmatpush.bf16.msra.mxu0 %v200
    %264 = vmatpush.bf16.msra.mxu0 %v197
    %265 = vmatmul.bf16.gmra.mxu0 %v80
    %v266 = vpop.f32.mrf.mxu0
    %v267 = vadd.f32 %v114, %v266
    %v268 = vpop.f32.mrf.mxu0
    %269 = vdwg.mxu0
    %270 = vmatpush.bf16.msra.mxu0 %v219
    %271 = vmatpush.bf16.msra.mxu0 %v216
    %272 = vmatpush.bf16.msra.mxu0 %v213
    %273 = vmatpush.bf16.msra.mxu0 %v210
    %274 = vmatpush.bf16.msra.mxu0 %v207
    %275 = vmatpush.bf16.msra.mxu0 %v204
    %276 = vmatpush.bf16.msra.mxu0 %v201
    %277 = vmatpush.bf16.msra.mxu0 %v198
    %278 = vmatmul.bf16.gmra.mxu0 %v80
    %v279 = vpop.f32.mrf.mxu0
    %v280 = vadd.f32 %v115, %v279
    %v281 = vpop.f32.mrf.mxu0
    %282 = vdwg.mxu0
    %v283 = vadd.f32 %v254, %v267
    %v284 = vadd.f32 %v283, %v280
    %285 = vadd.xlane.f32.xlu0 %v284
    %v286 = vpop.xlane.xlu0 %285
    %v287 = vmul.f32 %v286, 0.0029761905
    %v288 = vmul.f32 %v254, %v254
    %v289 = vmul.f32 %v267, %v267
    %v290 = vmul.f32 %v280, %v280
    %v291 = vadd.f32 %v288, %v289
    %v292 = vadd.f32 %v291, %v290
    %293 = vadd.xlane.f32.xlu0 %v292
    %v294 = vpop.xlane.xlu0 %293
    %v295 = vmul.f32 %v294, 0.0029761905
    %v296 = vmul.f32 %v287, %v287
    %v297 = vsub.f32 %v295, %v296
    %v298 = vmax.f32 %v297, 0.0
    %v299 = vsub.f32 %v254, %v287
    %v300 = vsub.f32 %v267, %v287
    %v301 = vsub.f32 %v280, %v287
    %v302 = vadd.f32 %v298, 1e-05
    %v303 = vrsqrt.pop %v302
    %v304 = vmul.f32 %v303, %v302
    %v305 = vmul.f32 %v304, %v303
    %v306 = vmul.f32 0.5, %v305
    %v307 = vsub.f32 1.5, %v306
    %v308 = vmul.f32 %v303, %v307
    %vm309 = vweird.f32 %v302
    %vm310 = vweird.f32 %v303
    %vm311 = vmor %vm309, %vm310
    %v312 = vsel %vm311, %v303, %v308
    %v313 = vmul.f32 %v299, %v312
    %v314 = vmul.f32 %v300, %v312
    %v315 = vmul.f32 %v301, %v312
    %v316 = vperm.slane %v77, 1
    %v317 = vperm.slane %v78, 1
    %v318 = vperm.slane %v79, 1
    %v319 = vmul.f32 %v313, %v316
    %v320 = vmul.f32 %v314, %v317
    %v321 = vmul.f32 %v315, %v318
    %v322 = vperm.slane %v77, 2
    %v323 = vperm.slane %v78, 2
    %v324 = vperm.slane %v79, 2
    %v325 = vadd.f32 %v319, %v322
    %v326 = vadd.f32 %v320, %v323
    %v327 = vadd.f32 %v321, %v324
    %v328 = vpack.c.bf16 %v325, %v325
    %v329 = vpack.c.bf16 %v326, %v326
    %v330 = vpack.c.bf16 %v327, %v327
    %v331 = vld [vmem:[#allocation7] sm:$0xff]
    %v332 = vld [vmem:[#allocation7 + $0x8] sm:$0xf]
    %v333 = vld [vmem:[#allocation7 + $0xc] sm:$0xff]
    %v334 = vld [vmem:[#allocation7 + $0x14] sm:$0xf]
    %v335 = vld [vmem:[#allocation7 + $0x18] sm:$0xff]
    %v336 = vld [vmem:[#allocation7 + $0x20] sm:$0xf]
    %v337 = vld [vmem:[#allocation7 + $0x24] sm:$0xff]
    %v338 = vld [vmem:[#allocation7 + $0x2c] sm:$0xf]
    %v339 = vld [vmem:[#allocation7 + $0x30] sm:$0xff]
    %v340 = vld [vmem:[#allocation7 + $0x38] sm:$0xf]
    %v341 = vld [vmem:[#allocation7 + $0x3c] sm:$0xff]
    %v342 = vld [vmem:[#allocation7 + $0x44] sm:$0xf]
    %v343 = vld [vmem:[#allocation7 + $0x48] sm:$0xff]
    %v344 = vld [vmem:[#allocation7 + $0x50] sm:$0xf]
    %v345 = vld [vmem:[#allocation7 + $0x54] sm:$0xff]
    %v346 = vld [vmem:[#allocation7 + $0x5c] sm:$0xf]
    %v347 = vld [vmem:[#allocation7 + $0x60] sm:$0xff]
    %v348 = vld [vmem:[#allocation7 + $0x68] sm:$0xf]
    %v349 = vld [vmem:[#allocation7 + $0x6c] sm:$0xff]
    %v350 = vld [vmem:[#allocation7 + $0x74] sm:$0xf]
    %v351 = vld [vmem:[#allocation7 + $0x78] sm:$0xff]
    %v352 = vld [vmem:[#allocation7 + $0x80] sm:$0xf]
    %v353 = vld [vmem:[#allocation7 + $0x84] sm:$0xff]
    %v354 = vld [vmem:[#allocation7 + $0x8c] sm:$0xf]
    %v355 = vld [vmem:[#allocation7 + $0x90] sm:$0xff]
    %v356 = vld [vmem:[#allocation7 + $0x98] sm:$0xf]
    %v357 = vld [vmem:[#allocation7 + $0x9c] sm:$0xff]
    %v358 = vld [vmem:[#allocation7 + $0xa4] sm:$0xf]
    %v359 = vld [vmem:[#allocation7 + $0xa8] sm:$0xff]
    %v360 = vld [vmem:[#allocation7 + $0xb0] sm:$0xf]
    %v361 = vld [vmem:[#allocation7 + $0xb4] sm:$0xff]
    %v362 = vld [vmem:[#allocation7 + $0xbc] sm:$0xf]
    %v363 = vld [vmem:[#allocation7 + $0xc0] sm:$0xff]
    %v364 = vld [vmem:[#allocation7 + $0xc8] sm:$0xf]
    %v365 = vld [vmem:[#allocation7 + $0xcc] sm:$0xff]
    %v366 = vld [vmem:[#allocation7 + $0xd4] sm:$0xf]
    %v367 = vld [vmem:[#allocation7 + $0xd8] sm:$0xff]
    %v368 = vld [vmem:[#allocation7 + $0xe0] sm:$0xf]
    %v369 = vld [vmem:[#allocation7 + $0xe4] sm:$0xff]
    %v370 = vld [vmem:[#allocation7 + $0xec] sm:$0xf]
    %v371 = vld [vmem:[#allocation7 + $0xf0] sm:$0xff]
    %v372 = vld [vmem:[#allocation7 + $0xf8] sm:$0xf]
    %v373 = vld [vmem:[#allocation7 + $0xfc] sm:$0xff]
    %v374 = vld [vmem:[#allocation7 + $0x104] sm:$0xf]
    %v375 = vld [vmem:[#allocation7 + $0x108] sm:$0xff]
    %v376 = vld [vmem:[#allocation7 + $0x110] sm:$0xf]
    %v377 = vld [vmem:[#allocation7 + $0x114] sm:$0xff]
    %v378 = vld [vmem:[#allocation7 + $0x11c] sm:$0xf]
    %v379 = vld [vmem:[#allocation7 + $0x120] sm:$0xff]
    %v380 = vld [vmem:[#allocation7 + $0x128] sm:$0xf]
    %v381 = vld [vmem:[#allocation7 + $0x12c] sm:$0xff]
    %v382 = vld [vmem:[#allocation7 + $0x134] sm:$0xf]
    %v383 = vld [vmem:[#allocation7 + $0x138] sm:$0xff]
    %v384 = vld [vmem:[#allocation7 + $0x140] sm:$0xf]
    %v385 = vld [vmem:[#allocation7 + $0x144] sm:$0xff]
    %v386 = vld [vmem:[#allocation7 + $0x14c] sm:$0xf]
    %v387 = vld [vmem:[#allocation7 + $0x150] sm:$0xff]
    %v388 = vld [vmem:[#allocation7 + $0x158] sm:$0xf]
    %v389 = vld [vmem:[#allocation7 + $0x15c] sm:$0xff]
    %v390 = vld [vmem:[#allocation7 + $0x164] sm:$0xf]
    %v391 = vld [vmem:[#allocation7 + $0x168] sm:$0xff]
    %v392 = vld [vmem:[#allocation7 + $0x170] sm:$0xf]
    %v393 = vld [vmem:[#allocation7 + $0x174] sm:$0xff]
    %v394 = vld [vmem:[#allocation7 + $0x17c] sm:$0xf]
    %v395 = vld [vmem:[#allocation7 + $0x180] sm:$0xff]
    %v396 = vld [vmem:[#allocation7 + $0x188] sm:$0xf]
    %v397 = vld [vmem:[#allocation7 + $0x18c] sm:$0xff]
    %v398 = vld [vmem:[#allocation7 + $0x194] sm:$0xf]
    %v399 = vld [vmem:[#allocation7 + $0x198] sm:$0xff]
    %v400 = vld [vmem:[#allocation7 + $0x1a0] sm:$0xf]
    %v401 = vld [vmem:[#allocation7 + $0x1a4] sm:$0xff]
    %v402 = vld [vmem:[#allocation7 + $0x1ac] sm:$0xf]
    %v403 = vld [vmem:[#allocation7 + $0x1b0] sm:$0xff]
    %v404 = vld [vmem:[#allocation7 + $0x1b8] sm:$0xf]
    %v405 = vld [vmem:[#allocation7 + $0x1bc] sm:$0xff]
    %v406 = vld [vmem:[#allocation7 + $0x1c4] sm:$0xf]
    %v407 = vld [vmem:[#allocation7 + $0x1c8] sm:$0xff]
    %v408 = vld [vmem:[#allocation7 + $0x1d0] sm:$0xf]
    %v409 = vld [vmem:[#allocation7 + $0x1d4] sm:$0xff]
    %v410 = vld [vmem:[#allocation7 + $0x1dc] sm:$0xf]
    %v411 = vld [vmem:[#allocation7 + $0x1e0] sm:$0xff]
    %v412 = vld [vmem:[#allocation7 + $0x1e8] sm:$0xf]
    %v413 = vld [vmem:[#allocation7 + $0x1ec] sm:$0xff]
    %v414 = vld [vmem:[#allocation7 + $0x1f4] sm:$0xf]
    %v415 = vld [vmem:[#allocation7 + $0x1f8] sm:$0xff]
    %v416 = vld [vmem:[#allocation7 + $0x200] sm:$0xf]
    %v417 = vld [vmem:[#allocation7 + $0x204] sm:$0xff]
    %v418 = vld [vmem:[#allocation7 + $0x20c] sm:$0xf]
    %v419 = vld [vmem:[#allocation7 + $0x210] sm:$0xff]
    %v420 = vld [vmem:[#allocation7 + $0x218] sm:$0xf]
    %v421 = vld [vmem:[#allocation7 + $0x21c] sm:$0xff]
    %v422 = vld [vmem:[#allocation7 + $0x224] sm:$0xf]
    %v423 = vld [vmem:[#allocation7 + $0x228] sm:$0xff]
    %v424 = vld [vmem:[#allocation7 + $0x230] sm:$0xf]
    %v425 = vld [vmem:[#allocation7 + $0x234] sm:$0xff]
    %v426 = vld [vmem:[#allocation7 + $0x23c] sm:$0xf]
    %v427 = vperm.slane %v77, 3
    %v428 = vperm.slane %v78, 3
    %v429 = vperm.slane %v79, 3
    %v526 = vunpack.c.l.b16 %v331
    %v527 = vunpack.c.h.b16 %v331
    %v528 = vunpack.c.l.b16 %v332
    %v529 = vunpack.c.l.b16 %v333
    %v530 = vunpack.c.h.b16 %v333
    %v531 = vunpack.c.l.b16 %v334
    %v532 = vunpack.c.l.b16 %v335
    %v533 = vunpack.c.h.b16 %v335
    %v534 = vunpack.c.l.b16 %v336
    %v535 = vunpack.c.l.b16 %v337
    %v536 = vunpack.c.h.b16 %v337
    %v537 = vunpack.c.l.b16 %v338
    %v538 = vunpack.c.l.b16 %v339
    %v539 = vunpack.c.h.b16 %v339
    %v540 = vunpack.c.l.b16 %v340
    %v541 = vunpack.c.l.b16 %v341
    %v542 = vunpack.c.h.b16 %v341
    %v543 = vunpack.c.l.b16 %v342
    %v544 = vunpack.c.l.b16 %v343
    %v545 = vunpack.c.h.b16 %v343
    %v546 = vunpack.c.l.b16 %v344
    %v547 = vunpack.c.l.b16 %v345
    %v548 = vunpack.c.h.b16 %v345
    %v549 = vunpack.c.l.b16 %v346
    %v550 = vunpack.c.l.b16 %v347
    %v551 = vunpack.c.h.b16 %v347
    %v552 = vunpack.c.l.b16 %v348
    %v553 = vunpack.c.l.b16 %v349
    %v554 = vunpack.c.h.b16 %v349
    %v555 = vunpack.c.l.b16 %v350
    %v556 = vunpack.c.l.b16 %v351
    %v557 = vunpack.c.h.b16 %v351
    %v558 = vunpack.c.l.b16 %v352
    %v559 = vunpack.c.l.b16 %v353
    %v560 = vunpack.c.h.b16 %v353
    %v561 = vunpack.c.l.b16 %v354
    %v562 = vunpack.c.l.b16 %v355
    %v563 = vunpack.c.h.b16 %v355
    %v564 = vunpack.c.l.b16 %v356
    %v565 = vunpack.c.l.b16 %v357
    %v566 = vunpack.c.h.b16 %v357
    %v567 = vunpack.c.l.b16 %v358
    %v568 = vunpack.c.l.b16 %v359
    %v569 = vunpack.c.h.b16 %v359
    %v570 = vunpack.c.l.b16 %v360
    %v571 = vunpack.c.l.b16 %v361
    %v572 = vunpack.c.h.b16 %v361
    %v573 = vunpack.c.l.b16 %v362
    %v574 = vunpack.c.l.b16 %v363
    %v575 = vunpack.c.h.b16 %v363
    %v576 = vunpack.c.l.b16 %v364
    %v577 = vunpack.c.l.b16 %v365
    %v578 = vunpack.c.h.b16 %v365
    %v579 = vunpack.c.l.b16 %v366
    %v580 = vunpack.c.l.b16 %v367
    %v581 = vunpack.c.h.b16 %v367
    %v582 = vunpack.c.l.b16 %v368
    %v583 = vunpack.c.l.b16 %v369
    %v584 = vunpack.c.h.b16 %v369
    %v585 = vunpack.c.l.b16 %v370
    %v586 = vunpack.c.l.b16 %v371
    %v587 = vunpack.c.h.b16 %v371
    %v588 = vunpack.c.l.b16 %v372
    %v589 = vunpack.c.l.b16 %v373
    %v590 = vunpack.c.h.b16 %v373
    %v591 = vunpack.c.l.b16 %v374
    %v592 = vunpack.c.l.b16 %v375
    %v593 = vunpack.c.h.b16 %v375
    %v594 = vunpack.c.l.b16 %v376
    %v595 = vunpack.c.l.b16 %v377
    %v596 = vunpack.c.h.b16 %v377
    %v597 = vunpack.c.l.b16 %v378
    %v598 = vunpack.c.l.b16 %v379
    %v599 = vunpack.c.h.b16 %v379
    %v600 = vunpack.c.l.b16 %v380
    %v601 = vunpack.c.l.b16 %v381
    %v602 = vunpack.c.h.b16 %v381
    %v603 = vunpack.c.l.b16 %v382
    %v604 = vunpack.c.l.b16 %v383
    %v605 = vunpack.c.h.b16 %v383
    %v606 = vunpack.c.l.b16 %v384
    %v607 = vunpack.c.l.b16 %v385
    %v608 = vunpack.c.h.b16 %v385
    %v609 = vunpack.c.l.b16 %v386
    %v610 = vunpack.c.l.b16 %v387
    %v611 = vunpack.c.h.b16 %v387
    %v612 = vunpack.c.l.b16 %v388
    %v613 = vunpack.c.l.b16 %v389
    %v614 = vunpack.c.h.b16 %v389
    %v615 = vunpack.c.l.b16 %v390
    %v616 = vunpack.c.l.b16 %v391
    %v617 = vunpack.c.h.b16 %v391
    %v618 = vunpack.c.l.b16 %v392
    %v619 = vunpack.c.l.b16 %v393
    %v620 = vunpack.c.h.b16 %v393
    %v621 = vunpack.c.l.b16 %v394
    %v622 = vunpack.c.l.b16 %v395
    %v623 = vunpack.c.h.b16 %v395
    %v624 = vunpack.c.l.b16 %v396
    %v625 = vunpack.c.l.b16 %v397
    %v626 = vunpack.c.h.b16 %v397
    %v627 = vunpack.c.l.b16 %v398
    %v628 = vunpack.c.l.b16 %v399
    %v629 = vunpack.c.h.b16 %v399
    %v630 = vunpack.c.l.b16 %v400
    %v631 = vunpack.c.l.b16 %v401
    %v632 = vunpack.c.h.b16 %v401
    %v633 = vunpack.c.l.b16 %v402
    %v634 = vunpack.c.l.b16 %v403
    %v635 = vunpack.c.h.b16 %v403
    %v636 = vunpack.c.l.b16 %v404
    %v637 = vunpack.c.l.b16 %v405
    %v638 = vunpack.c.h.b16 %v405
    %v639 = vunpack.c.l.b16 %v406
    %v640 = vunpack.c.l.b16 %v407
    %v641 = vunpack.c.h.b16 %v407
    %v642 = vunpack.c.l.b16 %v408
    %v643 = vunpack.c.l.b16 %v409
    %v644 = vunpack.c.h.b16 %v409
    %v645 = vunpack.c.l.b16 %v410
    %v646 = vunpack.c.l.b16 %v411
    %v647 = vunpack.c.h.b16 %v411
    %v648 = vunpack.c.l.b16 %v412
    %v649 = vunpack.c.l.b16 %v413
    %v650 = vunpack.c.h.b16 %v413
    %v651 = vunpack.c.l.b16 %v414
    %v652 = vunpack.c.l.b16 %v415
    %v653 = vunpack.c.h.b16 %v415
    %v654 = vunpack.c.l.b16 %v416
    %v655 = vunpack.c.l.b16 %v417
    %v656 = vunpack.c.h.b16 %v417
    %v657 = vunpack.c.l.b16 %v418
    %v658 = vunpack.c.l.b16 %v419
    %v659 = vunpack.c.h.b16 %v419
    %v660 = vunpack.c.l.b16 %v420
    %v661 = vunpack.c.l.b16 %v421
    %v662 = vunpack.c.h.b16 %v421
    %v663 = vunpack.c.l.b16 %v422
    %v664 = vunpack.c.l.b16 %v423
    %v665 = vunpack.c.h.b16 %v423
    %v666 = vunpack.c.l.b16 %v424
    %v667 = vunpack.c.l.b16 %v425
    %v668 = vunpack.c.h.b16 %v425
    %v669 = vunpack.c.l.b16 %v426
    %v670 = vpack.c.b16 %v529, %v526
    %v671 = vpack.c.b16 %v530, %v527
    %v672 = vpack.c.b16 %v531, %v528
    %v673 = vpack.c.b16 %v535, %v532
    %v674 = vpack.c.b16 %v536, %v533
    %v675 = vpack.c.b16 %v537, %v534
    %v676 = vpack.c.b16 %v541, %v538
    %v677 = vpack.c.b16 %v542, %v539
    %v678 = vpack.c.b16 %v543, %v540
    %v679 = vpack.c.b16 %v547, %v544
    %v680 = vpack.c.b16 %v548, %v545
    %v681 = vpack.c.b16 %v549, %v546
    %v682 = vpack.c.b16 %v553, %v550
    %v683 = vpack.c.b16 %v554, %v551
    %v684 = vpack.c.b16 %v555, %v552
    %v685 = vpack.c.b16 %v559, %v556
    %v686 = vpack.c.b16 %v560, %v557
    %v687 = vpack.c.b16 %v561, %v558
    %v688 = vpack.c.b16 %v565, %v562
    %v689 = vpack.c.b16 %v566, %v563
    %v690 = vpack.c.b16 %v567, %v564
    %v691 = vpack.c.b16 %v571, %v568
    %v692 = vpack.c.b16 %v572, %v569
    %v693 = vpack.c.b16 %v573, %v570
    %v694 = vpack.c.b16 %v577, %v574
    %v695 = vpack.c.b16 %v578, %v575
    %v696 = vpack.c.b16 %v579, %v576
    %v697 = vpack.c.b16 %v583, %v580
    %v698 = vpack.c.b16 %v584, %v581
    %v699 = vpack.c.b16 %v585, %v582
    %v700 = vpack.c.b16 %v589, %v586
    %v701 = vpack.c.b16 %v590, %v587
    %v702 = vpack.c.b16 %v591, %v588
    %v703 = vpack.c.b16 %v595, %v592
    %v704 = vpack.c.b16 %v596, %v593
    %v705 = vpack.c.b16 %v597, %v594
    %v706 = vpack.c.b16 %v601, %v598
    %v707 = vpack.c.b16 %v602, %v599
    %v708 = vpack.c.b16 %v603, %v600
    %v709 = vpack.c.b16 %v607, %v604
    %v710 = vpack.c.b16 %v608, %v605
    %v711 = vpack.c.b16 %v609, %v606
    %v712 = vpack.c.b16 %v613, %v610
    %v713 = vpack.c.b16 %v614, %v611
    %v714 = vpack.c.b16 %v615, %v612
    %v715 = vpack.c.b16 %v619, %v616
    %v716 = vpack.c.b16 %v620, %v617
    %v717 = vpack.c.b16 %v621, %v618
    %v718 = vpack.c.b16 %v625, %v622
    %v719 = vpack.c.b16 %v626, %v623
    %v720 = vpack.c.b16 %v627, %v624
    %v721 = vpack.c.b16 %v631, %v628
    %v722 = vpack.c.b16 %v632, %v629
    %v723 = vpack.c.b16 %v633, %v630
    %v724 = vpack.c.b16 %v637, %v634
    %v725 = vpack.c.b16 %v638, %v635
    %v726 = vpack.c.b16 %v639, %v636
    %v727 = vpack.c.b16 %v643, %v640
    %v728 = vpack.c.b16 %v644, %v641
    %v729 = vpack.c.b16 %v645, %v642
    %v730 = vpack.c.b16 %v649, %v646
    %v731 = vpack.c.b16 %v650, %v647
    %v732 = vpack.c.b16 %v651, %v648
    %v733 = vpack.c.b16 %v655, %v652
    %v734 = vpack.c.b16 %v656, %v653
    %v735 = vpack.c.b16 %v657, %v654
    %v736 = vpack.c.b16 %v661, %v658
    %v737 = vpack.c.b16 %v662, %v659
    %v738 = vpack.c.b16 %v663, %v660
    %v739 = vpack.c.b16 %v667, %v664
    %v740 = vpack.c.b16 %v668, %v665
    %v741 = vpack.c.b16 %v669, %v666
    %814 = vmatpush.bf16.msra.mxu0 %v691
    %815 = vmatpush.bf16.msra.mxu0 %v688
    %816 = vmatpush.bf16.msra.mxu0 %v685
    %817 = vmatpush.bf16.msra.mxu0 %v682
    %818 = vmatpush.bf16.msra.mxu0 %v679
    %819 = vmatpush.bf16.msra.mxu0 %v676
    %820 = vmatpush.bf16.msra.mxu0 %v673
    %821 = vmatpush.bf16.msra.mxu0 %v670
    %822 = vmatmul.bf16.gmra.mxu0 %v328
    %v823 = vpop.f32.mrf.mxu0
    %v824 = vadd.f32 %v427, %v823
    %v825 = vpop.f32.mrf.mxu0
    %826 = vdwg.mxu0
    %827 = vmatpush.bf16.msra.mxu0 %v715
    %828 = vmatpush.bf16.msra.mxu0 %v712
    %829 = vmatpush.bf16.msra.mxu0 %v709
    %830 = vmatpush.bf16.msra.mxu0 %v706
    %831 = vmatpush.bf16.msra.mxu0 %v703
    %832 = vmatpush.bf16.msra.mxu0 %v700
    %833 = vmatpush.bf16.msra.mxu0 %v697
    %834 = vmatpush.bf16.msra.mxu0 %v694
    %835 = vmatmul.bf16.gmra.mxu0 %v329
    %v836 = vpop.f32.mrf.mxu0
    %v837 = vadd.f32 %v824, %v836
    %v838 = vpop.f32.mrf.mxu0
    %839 = vdwg.mxu0
    %840 = vmatpush.bf16.msra.mxu0 %v739
    %841 = vmatpush.bf16.msra.mxu0 %v736
    %842 = vmatpush.bf16.msra.mxu0 %v733
    %843 = vmatpush.bf16.msra.mxu0 %v730
    %844 = vmatpush.bf16.msra.mxu0 %v727
    %845 = vmatpush.bf16.msra.mxu0 %v724
    %846 = vmatpush.bf16.msra.mxu0 %v721
    %847 = vmatpush.bf16.msra.mxu0 %v718
    %848 = vmatmul.bf16.gmra.mxu0 %v330
    %v849 = vpop.f32.mrf.mxu0
    %v850 = vadd.f32 %v837, %v849
    %v851 = vpop.f32.mrf.mxu0
    %852 = vdwg.mxu0
    %853 = vmatpush.bf16.msra.mxu0 %v692
    %854 = vmatpush.bf16.msra.mxu0 %v689
    %855 = vmatpush.bf16.msra.mxu0 %v686
    %856 = vmatpush.bf16.msra.mxu0 %v683
    %857 = vmatpush.bf16.msra.mxu0 %v680
    %858 = vmatpush.bf16.msra.mxu0 %v677
    %859 = vmatpush.bf16.msra.mxu0 %v674
    %860 = vmatpush.bf16.msra.mxu0 %v671
    %861 = vmatmul.bf16.gmra.mxu0 %v328
    %v862 = vpop.f32.mrf.mxu0
    %v863 = vadd.f32 %v428, %v862
    %v864 = vpop.f32.mrf.mxu0
    %865 = vdwg.mxu0
    %866 = vmatpush.bf16.msra.mxu0 %v716
    %867 = vmatpush.bf16.msra.mxu0 %v713
    %868 = vmatpush.bf16.msra.mxu0 %v710
    %869 = vmatpush.bf16.msra.mxu0 %v707
    %870 = vmatpush.bf16.msra.mxu0 %v704
    %871 = vmatpush.bf16.msra.mxu0 %v701
    %872 = vmatpush.bf16.msra.mxu0 %v698
    %873 = vmatpush.bf16.msra.mxu0 %v695
    %874 = vmatmul.bf16.gmra.mxu0 %v329
    %v875 = vpop.f32.mrf.mxu0
    %v876 = vadd.f32 %v863, %v875
    %v877 = vpop.f32.mrf.mxu0
    %878 = vdwg.mxu0
    %879 = vmatpush.bf16.msra.mxu0 %v740
    %880 = vmatpush.bf16.msra.mxu0 %v737
    %881 = vmatpush.bf16.msra.mxu0 %v734
    %882 = vmatpush.bf16.msra.mxu0 %v731
    %883 = vmatpush.bf16.msra.mxu0 %v728
    %884 = vmatpush.bf16.msra.mxu0 %v725
    %885 = vmatpush.bf16.msra.mxu0 %v722
    %886 = vmatpush.bf16.msra.mxu0 %v719
    %887 = vmatmul.bf16.gmra.mxu0 %v330
    %v888 = vpop.f32.mrf.mxu0
    %v889 = vadd.f32 %v876, %v888
    %v890 = vpop.f32.mrf.mxu0
    %891 = vdwg.mxu0
    %892 = vmatpush.bf16.msra.mxu0 %v693
    %893 = vmatpush.bf16.msra.mxu0 %v690
    %894 = vmatpush.bf16.msra.mxu0 %v687
    %895 = vmatpush.bf16.msra.mxu0 %v684
    %896 = vmatpush.bf16.msra.mxu0 %v681
    %897 = vmatpush.bf16.msra.mxu0 %v678
    %898 = vmatpush.bf16.msra.mxu0 %v675
    %899 = vmatpush.bf16.msra.mxu0 %v672
    %900 = vmatmul.bf16.gmra.mxu0 %v328
    %v901 = vpop.f32.mrf.mxu0
    %v902 = vadd.f32 %v429, %v901
    %v903 = vpop.f32.mrf.mxu0
    %904 = vdwg.mxu0
    %905 = vmatpush.bf16.msra.mxu0 %v717
    %906 = vmatpush.bf16.msra.mxu0 %v714
    %907 = vmatpush.bf16.msra.mxu0 %v711
    %908 = vmatpush.bf16.msra.mxu0 %v708
    %909 = vmatpush.bf16.msra.mxu0 %v705
    %910 = vmatpush.bf16.msra.mxu0 %v702
    %911 = vmatpush.bf16.msra.mxu0 %v699
    %912 = vmatpush.bf16.msra.mxu0 %v696
    %913 = vmatmul.bf16.gmra.mxu0 %v329
    %v914 = vpop.f32.mrf.mxu0
    %v915 = vadd.f32 %v902, %v914
    %v916 = vpop.f32.mrf.mxu0
    %917 = vdwg.mxu0
    %918 = vmatpush.bf16.msra.mxu0 %v741
    %919 = vmatpush.bf16.msra.mxu0 %v738
    %920 = vmatpush.bf16.msra.mxu0 %v735
    %921 = vmatpush.bf16.msra.mxu0 %v732
    %922 = vmatpush.bf16.msra.mxu0 %v729
    %923 = vmatpush.bf16.msra.mxu0 %v726
    %924 = vmatpush.bf16.msra.mxu0 %v723
    %925 = vmatpush.bf16.msra.mxu0 %v720
    %926 = vmatmul.bf16.gmra.mxu0 %v330
    %v927 = vpop.f32.mrf.mxu0
    %v928 = vadd.f32 %v915, %v927
    %v929 = vpop.f32.mrf.mxu0
    %930 = vdwg.mxu0
    %v931 = vadd.f32 %v850, %v889
    %v932 = vadd.f32 %v931, %v928
    %933 = vadd.xlane.f32.xlu0 %v932
    %v934 = vpop.xlane.xlu0 %933
    %v935 = vmul.f32 %v934, 0.0029761905
    %v936 = vmul.f32 %v850, %v850
    %v937 = vmul.f32 %v889, %v889
    %v938 = vmul.f32 %v928, %v928
    %v939 = vadd.f32 %v936, %v937
    %v940 = vadd.f32 %v939, %v938
    %941 = vadd.xlane.f32.xlu0 %v940
    %v942 = vpop.xlane.xlu0 %941
    %v943 = vmul.f32 %v942, 0.0029761905
    %v944 = vmul.f32 %v935, %v935
    %v945 = vsub.f32 %v943, %v944
    %v946 = vmax.f32 %v945, 0.0
    %v947 = vsub.f32 %v850, %v935
    %v948 = vsub.f32 %v889, %v935
    %v949 = vsub.f32 %v928, %v935
    %v950 = vadd.f32 %v946, 1e-05
    %v951 = vrsqrt.pop %v950
    %v952 = vmul.f32 %v951, %v950
    %v953 = vmul.f32 %v952, %v951
    %v954 = vmul.f32 0.5, %v953
    %v955 = vsub.f32 1.5, %v954
    %v956 = vmul.f32 %v951, %v955
    %vm957 = vweird.f32 %v950
    %vm958 = vweird.f32 %v951
    %vm959 = vmor %vm957, %vm958
    %v960 = vsel %vm959, %v951, %v956
    %v961 = vmul.f32 %v947, %v960
    %v962 = vmul.f32 %v948, %v960
    %v963 = vmul.f32 %v949, %v960
    %v964 = vperm.slane %v77, 4
    %v965 = vperm.slane %v78, 4
    %v966 = vperm.slane %v79, 4
    %v967 = vmul.f32 %v961, %v964
    %v968 = vmul.f32 %v962, %v965
    %v969 = vmul.f32 %v963, %v966
    %v970 = vperm.slane %v77, 5
    %v971 = vperm.slane %v78, 5
    %v972 = vperm.slane %v79, 5
    %v973 = vadd.f32 %v967, %v970
    %v974 = vadd.f32 %v968, %v971
    %v975 = vadd.f32 %v969, %v972
    %v976 = vadd.f32 %v325, %v973
    %v977 = vadd.f32 %v326, %v974
    %v978 = vadd.f32 %v327, %v975
    %v979 = vmul.f32 %v976, 0.01
    %v980 = vmul.f32 %v977, 0.01
    %v981 = vmul.f32 %v978, 0.01
    %v982 = vmax.f32 %v976, %v979
    %v983 = vmax.f32 %v977, %v980
    %v984 = vmax.f32 %v978, %v981
    %v985 = vpack.c.bf16 %v983, %v982
    %v986 = vpack.c.bf16 %v984, %v984
    %987 = vst [vmem:[#allocation10] sm:$0xff] %v985
    %988 = vst [vmem:[#allocation10 + $0x8] sm:$0xf] %v986
    // Predicated region
    $region34: #{tpu_custom_call.1} parent=1 // pred_check
      _
    $region35: #{tpu_custom_call.1} parent=1 // pred_check_branch
      %990 = sbr.rel (0) target = $region37
    $region36: #{tpu_custom_call.1} parent=1 // pred_region
      %992 = vsyncadd [#allocation4], 0
      %s994 = sshll.u32 [#allocation10], 4
      %s995 = int_to_ptr.vmem [resolvable:$true] %s994
      %s996 = sshll.u32 %s4, 4
      %s997 = int_to_ptr.hbm [resolvable:$true] %s996
      %999 = dma.vmem_to_hbm [thread:$0]  %s995, 192, %s997, [#allocation4]
    $region37: #{tpu_custom_call.1} parent=1 // pred_fallthru
      _
    // Predicated region
    $region38: #{tpu_custom_call.1} parent=1 // pred_check
      _
    $region39: #{tpu_custom_call.1} parent=1 // pred_check_branch
      %1001 = sbr.rel (0) target = $region41
    $region40: #{tpu_custom_call.1} parent=1 // pred_region
      %1003 = dma.done [#allocation4], 192
    $region41: #{tpu_custom_call.1} parent=1 // pred_fallthru
      _
    %1004 = vsyncpa [#allocation3], 1
    %1005 = vsyncpa [#allocation6], 1
    %1006 = vsyncpa [#allocation9], 1
    %1007 = vsyncpa [#allocation4], 1

</llo_original>
